<compile_context>
chip_gen: v5e
topology: v5e:2x2
jax: 0.10.0
libtpu: 0.0.40
codegen_flags: <defaults>
</compile_context>

<pallas_src>
import functools

import jax
import jax.numpy as jnp
from jax.experimental import pallas as pl
from jax.experimental.pallas import tpu as pltpu

EPS = 1e-5

# Packed-parameter slab layout: one (80, 16) f32 slab, every entry starting on
# an 8-row (sublane) boundary.  "P" blocks hold [bias, gamma, beta] columns.
SLAB_COLS = 16
SLAB_ROWS = 80
OFF_W1, OFF_P1 = 0, 16     # w1 (16,8),  p1 (16,3)
OFF_W2, OFF_P2 = 32, 40    # w2 (8,16),  p2 (8,3)
OFF_W3, OFF_P3 = 48, 56    # w3 (4,8),   p3 (4,3)
OFF_W4, OFF_P4 = 64, 72    # w4 (1,4),   p4 (1,1)  (bias only, no BN)

# Fused-path gate: peak resident activations are ~200 B per batch element, so
# 32768 elements stay well inside a 32 MiB scoped-VMEM budget, which is safe
# on every generation (v7x: 64 MiB physical / 32 MiB default scoped; v5e/v6e
# have 128 MiB and could raise this, but we keep one v7x-safe gate).
FUSED_MAX_N = 32768


# ---------------------------------------------------------------------------
# Parameter packing (done ONCE per parameter set, outside the jitted forward).
# ---------------------------------------------------------------------------
def pack_params(params):
    def put(slab, off, a):
        a = jnp.asarray(a, jnp.float32)
        a = jnp.pad(a, ((0, 0), (0, SLAB_COLS - a.shape[1])))
        return slab.at[off:off + a.shape[0], :].set(a)

    slab = jnp.zeros((SLAB_ROWS, SLAB_COLS), jnp.float32)
    slab = put(slab, OFF_W1, params["w1"])
    slab = put(slab, OFF_P1, jnp.stack([params["b1"], params["g1"], params["be1"]], 1))
    slab = put(slab, OFF_W2, params["w2"])
    slab = put(slab, OFF_P2, jnp.stack([params["b2"], params["g2"], params["be2"]], 1))
    slab = put(slab, OFF_W3, params["w3"])
    slab = put(slab, OFF_P3, jnp.stack([params["b3"], params["g3"], params["be3"]], 1))
    slab = put(slab, OFF_W4, params["w4"])
    slab = put(slab, OFF_P4, params["b4"].reshape(1, 1))
    return slab


# ---------------------------------------------------------------------------
# Kernel building blocks (batch on lanes, features on sublanes).
# ---------------------------------------------------------------------------
def _linear_vpu(slab_ref, x, w_off, p_off, in_f, out_f, n):
    """y = W @ x + b as an unrolled broadcast-FMA loop (VPU).
    (Switch to jnp.dot(w, x, preferred_element_type=f32) only if a bundle
    dump shows VALU binding -- at these sizes the kernel is overhead-bound.)"""
    w = slab_ref[w_off:w_off + out_f, 0:in_f]            # (out_f, in_f)
    b = slab_ref[p_off:p_off + out_f, 0:1]               # (out_f, 1)
    acc = jnp.broadcast_to(b, (out_f, n))
    for i in range(in_f):
        acc = acc + w[:, i:i + 1] * x[i:i + 1, :]
    return acc


def _fused_kernel(slab_ref, x_ref, o_ref, *, n_valid, n_pad):
    """Whole forward in one kernel: activations never leave VMEM."""
    lane = jax.lax.broadcasted_iota(jnp.int32, (1, n_pad), 1)
    valid = lane < n_valid
    inv_n = 1.0 / n_valid

    def swish(v):
        return v * jax.nn.sigmoid(v)

    def batchnorm(h, p_off, out_f):
        # Centered two-pass whole-batch statistics (padded lanes masked out).
        hm = jnp.where(valid, h, 0.0)
        mean = jnp.sum(hm, axis=1, keepdims=True) * inv_n        # (out_f, 1)
        d = jnp.where(valid, h - mean, 0.0)
        var = jnp.sum(d * d, axis=1, keepdims=True) * inv_n      # biased var
        gamma = slab_ref[p_off:p_off + out_f, 1:2]
        beta = slab_ref[p_off:p_off + out_f, 2:3]
        a = gamma * jax.lax.rsqrt(var + EPS)
        return a * (h - mean) + beta

    x0 = x_ref[...]                                              # (8, n_pad)
    h1 = batchnorm(swish(_linear_vpu(slab_ref, x0, OFF_W1, OFF_P1, 8, 16, n_pad)),
                   OFF_P1, 16)
    h2 = batchnorm(swish(_linear_vpu(slab_ref, h1, OFF_W2, OFF_P2, 16, 8, n_pad)),
                   OFF_P2, 8)
    h3 = batchnorm(swish(_linear_vpu(slab_ref, h2, OFF_W3, OFF_P3, 8, 4, n_pad)),
                   OFF_P3, 4)
    o_ref[...] = jax.nn.sigmoid(
        _linear_vpu(slab_ref, h3, OFF_W4, OFF_P4, 4, 1, n_pad))


def _stage_kernel(slab_ref, bn_ref, x_ref, h_ref, stats_ref, *,
                  w_off, p_off, in_f, out_f, block_n, n_valid):
    """Tiled path: BN(prev coefs) -> Linear -> swish -> centered tile stats."""
    a = bn_ref[:, 0:1]
    c = bn_ref[:, 1:2]
    x = a * x_ref[...] + c                                       # (in_f, block_n)

    acc = _linear_vpu(slab_ref, x, w_off, p_off, in_f, out_f, block_n)
    h = acc * jax.nn.sigmoid(acc)                                # swish
    h_ref[...] = h

    # Per-tile centered partials (sum, M2), merged via Chan's formula in
    # _bn_coef.  Masking covers padded lanes of the last / extra tiles.
    lane = jax.lax.broadcasted_iota(jnp.int32, (1, block_n), 1)
    valid = (lane + pl.program_id(0) * block_n) < n_valid
    cnt = jnp.maximum(
        jnp.minimum(n_valid - pl.program_id(0) * block_n, block_n), 1
    ).astype(jnp.float32)
    hm = jnp.where(valid, h, 0.0)
    s = jnp.sum(hm, axis=1, keepdims=True)                       # (out_f, 1)
    d = jnp.where(valid, h - s / cnt, 0.0)
    m2 = jnp.sum(d * d, axis=1, keepdims=True)                   # (out_f, 1)
    stats_ref[0] = jnp.concatenate([s, m2], axis=1)              # (out_f, 2)


def _final_kernel(slab_ref, bn_ref, x_ref, o_ref, *, block_n):
    """Tiled path: BN(layer-3 coefs) -> fc4 -> sigmoid, lane-dense output."""
    a = bn_ref[:, 0:1]
    c = bn_ref[:, 1:2]
    x = a * x_ref[...] + c                                       # (4, block_n)
    acc = _linear_vpu(slab_ref, x, OFF_W4, OFF_P4, 4, 1, block_n)
    o_ref[...] = jax.nn.sigmoid(acc)


# ---------------------------------------------------------------------------
# Tiled-path helpers.
# ---------------------------------------------------------------------------
def _run_stage(slab, bn_coef, x_t, *, w_off, p_off, in_f, out_f,
               block_n, n_valid, num_tiles):
    n_pad = num_tiles * block_n
    kernel = functools.partial(
        _stage_kernel, w_off=w_off, p_off=p_off, in_f=in_f, out_f=out_f,
        block_n=block_n, n_valid=n_valid)
    return pl.pallas_call(
        kernel,
        grid=(num_tiles,),
        in_specs=[
            pl.BlockSpec((SLAB_ROWS, SLAB_COLS), lambda i: (0, 0)),   # params
            pl.BlockSpec((in_f, 2), lambda i: (0, 0)),                # bn a/c
            pl.BlockSpec((in_f, block_n), lambda i: (0, i)),          # acts
        ],
        out_specs=(
            pl.BlockSpec((out_f, block_n), lambda i: (0, i)),         # pre-BN
            pl.BlockSpec((1, out_f, 2), lambda i: (i, 0, 0)),         # stats
        ),
        out_shape=(
            jax.ShapeDtypeStruct((out_f, n_pad), jnp.float32),
            jax.ShapeDtypeStruct((num_tiles, out_f, 2), jnp.float32),
        ),
        compiler_params=pltpu.CompilerParams(
            dimension_semantics=("parallel",),
            vmem_limit_bytes=32 * 1024 * 1024,
        ),
    )(slab, bn_coef, x_t)


def _bn_coef(stats, counts, slab, p_off, out_f, n):
    """Merge per-tile centered partials into per-feature (scale, shift)."""
    s_t = stats[:, :, 0]                                  # (T, f) tile sums
    m2_t = stats[:, :, 1]                                 # (T, f) centered SS
    mean = jnp.sum(s_t, axis=0) / n                       # (f,)
    mean_t = s_t / jnp.maximum(counts, 1.0)[:, None]
    var = (jnp.sum(m2_t, axis=0) +
           jnp.sum(counts[:, None] * (mean_t - mean[None, :]) ** 2, axis=0)) / n
    gamma = slab[p_off:p_off + out_f, 1]
    beta = slab[p_off:p_off + out_f, 2]
    a = gamma * jax.lax.rsqrt(var + EPS)
    c = beta - mean * a
    return jnp.stack([a, c], axis=1).astype(jnp.float32)  # (f, 2)


# ---------------------------------------------------------------------------
# Forward (fused fast path + tiled large-N fallback).
# ---------------------------------------------------------------------------
def _forward_fused(x, slab):
    n = x.shape[0]
    n_pad = -(-n // 512) * 512                            # lane-dense padding
    x_t = jnp.pad(x.astype(jnp.float32).T, ((0, 0), (0, n_pad - n)))  # (8,n_pad)
    out_t = pl.pallas_call(
        functools.partial(_fused_kernel, n_valid=n, n_pad=n_pad),
        out_shape=jax.ShapeDtypeStruct((1, n_pad), jnp.float32),
        compiler_params=pltpu.CompilerParams(
            vmem_limit_bytes=32 * 1024 * 1024),
    )(slab, x_t)
    return out_t[:, :n].T                                 # (n, 1)


def _forward_tiled(x, slab, block_n):
    n = x.shape[0]
    num_tiles = -(-n // block_n)
    if num_tiles % 2:      # keep grid shardable across both v7x TensorCores
        num_tiles += 1
    n_pad = num_tiles * block_n
    x_t = jnp.pad(x.astype(jnp.float32).T, ((0, 0), (0, n_pad - n)))  # (8,n_pad)

    counts = jnp.clip(n - jnp.arange(num_tiles) * block_n, 0, block_n
                      ).astype(jnp.float32)               # valid elems / tile
    ident8 = jnp.stack([jnp.ones((8,), jnp.float32),
                        jnp.zeros((8,), jnp.float32)], axis=1)

    common = dict(block_n=block_n, n_valid=n, num_tiles=num_tiles)
    h1, st1 = _run_stage(slab, ident8, x_t, w_off=OFF_W1, p_off=OFF_P1,
                         in_f=8, out_f=16, **common)
    bn1 = _bn_coef(st1, counts, slab, OFF_P1, 16, n)
    h2, st2 = _run_stage(slab, bn1, h1, w_off=OFF_W2, p_off=OFF_P2,
                         in_f=16, out_f=8, **common)
    bn2 = _bn_coef(st2, counts, slab, OFF_P2, 8, n)
    h3, st3 = _run_stage(slab, bn2, h2, w_off=OFF_W3, p_off=OFF_P3,
                         in_f=8, out_f=4, **common)
    bn3 = _bn_coef(st3, counts, slab, OFF_P3, 4, n)

    out_t = pl.pallas_call(
        functools.partial(_final_kernel, block_n=block_n),
        grid=(num_tiles,),
        in_specs=[
            pl.BlockSpec((SLAB_ROWS, SLAB_COLS), lambda i: (0, 0)),
            pl.BlockSpec((4, 2), lambda i: (0, 0)),
            pl.BlockSpec((4, block_n), lambda i: (0, i)),
        ],
        out_specs=pl.BlockSpec((1, block_n), lambda i: (0, i)),
        out_shape=jax.ShapeDtypeStruct((1, n_pad), jnp.float32),
        compiler_params=pltpu.CompilerParams(
            dimension_semantics=("parallel",),
            vmem_limit_bytes=32 * 1024 * 1024,
        ),
    )(slab, bn3, h3)
    return out_t[:, :n].T                                 # (n, 1)


@functools.partial(jax.jit, static_argnames=("block_n", "force_tiled"))
def network_forward(x, slab, block_n=4096, force_tiled=False):
    n = x.shape[0]
    if (not force_tiled) and n <= FUSED_MAX_N:
        return _forward_fused(x, slab)        # single-kernel, all-in-VMEM
    return _forward_tiled(x, slab, block_n)   # large-N fallback


# ---------------------------------------------------------------------------
# Deterministic init (PyTorch-style shapes) and pure-JAX reference.
# ---------------------------------------------------------------------------
def init_params(key):
    """Linear weights stored PyTorch-style as (out_features, in_features)."""
    ks = jax.random.split(key, 8)

    def linear(kw, kb, fan_in, fan_out):
        bound = 1.0 / (fan_in ** 0.5)
        w = jax.random.uniform(kw, (fan_out, fan_in), jnp.float32, -bound, bound)
        b = jax.random.uniform(kb, (fan_out,), jnp.float32, -bound, bound)
        return w, b

    w1, b1 = linear(ks[0], ks[1], 8, 16)
    w2, b2 = linear(ks[2], ks[3], 16, 8)
    w3, b3 = linear(ks[4], ks[5], 8, 4)
    w4, b4 = linear(ks[6], ks[7], 4, 1)
    return {
        "w1": w1, "b1": b1,
        "g1": jnp.ones((16,), jnp.float32), "be1": jnp.zeros((16,), jnp.float32),
        "w2": w2, "b2": b2,
        "g2": jnp.ones((8,), jnp.float32), "be2": jnp.zeros((8,), jnp.float32),
        "w3": w3, "b3": b3,
        "g3": jnp.ones((4,), jnp.float32), "be3": jnp.zeros((4,), jnp.float32),
        "w4": w4, "b4": b4,
    }


def _reference_forward(x, p):
    """Pure-JAX reference matching the PyTorch module (BN in training mode)."""
    def swish(v):
        return v * jax.nn.sigmoid(v)

    def bn(v, g, b):
        mu = jnp.mean(v, axis=0, keepdims=True)
        var = jnp.mean((v - mu) ** 2, axis=0, keepdims=True)
        return (v - mu) * jax.lax.rsqrt(var + EPS) * g + b

    h = bn(swish(x @ p["w1"].T + p["b1"]), p["g1"], p["be1"])
    h = bn(swish(h @ p["w2"].T + p["b2"]), p["g2"], p["be2"])
    h = bn(swish(h @ p["w3"].T + p["b3"]), p["g3"], p["be3"])
    return jax.nn.sigmoid(h @ p["w4"].T + p["b4"])


if __name__ == "__main__":
    key = jax.random.PRNGKey(0)
    k_x, k_p = jax.random.split(key)
    batch = 1000                      # not a tile multiple -> exercises masking
    x = jax.random.normal(k_x, (batch, 8), jnp.float32)
    params = init_params(k_p)
    slab = pack_params(params)        # packed once, outside the jitted forward

    # Fused single-kernel fast path (the normal path for N <= FUSED_MAX_N).
    out = network_forward(x, slab)
    out = jax.block_until_ready(out)

    # Tiled large-N fallback, forced here (4 batch tiles) to verify it too.
    out_tiled = network_forward(x, slab, block_n=256, force_tiled=True)
    out_tiled = jax.block_until_ready(out_tiled)

    ref = _reference_forward(x, params)
    assert out.shape == (batch, 1), out.shape
    err_fused = float(jnp.max(jnp.abs(out - ref)))
    err_tiled = float(jnp.max(jnp.abs(out_tiled - ref)))
    assert err_fused < 1e-4, err_fused
    assert err_tiled < 1e-4, err_tiled
    print("KERNEL_OK")
</pallas_src>

<mosaic_0001>
module attributes {stable_mosaic.version = 11 : i64} {
  func.func @_fused_kernel(%arg0: memref<80x16xf32, #tpu.memory_space<vmem>>, %arg1: memref<8x1024xf32, #tpu.memory_space<vmem>>, %arg2: memref<1x1024xf32, #tpu.memory_space<vmem>>) attributes {dimension_semantics = [], scalar_prefetch = 0 : i64, scratch_operands = 0 : i64, tpu.core_type = #tpu.core_type<tc>} {
    %0 = tpu.iota {dimensions = array<i32: 1>} : vector<1x1024xi32>
    %c1000_i32 = arith.constant 1000 : i32
    %1 = vector.broadcast %c1000_i32 : i32 to vector<1x1024xi32>
    %2 = arith.cmpi slt, %0, %1 : vector<1x1024xi32>
    %c0 = arith.constant 0 : index
    %c0_0 = arith.constant 0 : index
    %3 = vector.load %arg1[%c0, %c0_0] : memref<8x1024xf32, #tpu.memory_space<vmem>>, vector<8x1024xf32>
    %c0_1 = arith.constant 0 : index
    %c0_2 = arith.constant 0 : index
    %4 = vector.load %arg0[%c0_1, %c0_2] : memref<80x16xf32, #tpu.memory_space<vmem>>, vector<16x8xf32>
    %c16 = arith.constant 16 : index
    %c0_3 = arith.constant 0 : index
    %5 = vector.load %arg0[%c16, %c0_3] : memref<80x16xf32, #tpu.memory_space<vmem>>, vector<16x1xf32>
    %6 = vector.shape_cast %5 : vector<16x1xf32> to vector<16x1xf32>
    %7 = vector.broadcast %6 : vector<16x1xf32> to vector<16x1024xf32>
    %8 = vector.extract_strided_slice %4 {offsets = [0, 0], sizes = [16, 1], strides = [1, 1]} : vector<16x8xf32> to vector<16x1xf32>
    %9 = vector.extract_strided_slice %3 {offsets = [0, 0], sizes = [1, 1024], strides = [1, 1]} : vector<8x1024xf32> to vector<1x1024xf32>
    %10 = vector.broadcast %8 : vector<16x1xf32> to vector<16x1024xf32>
    %11 = vector.broadcast %9 : vector<1x1024xf32> to vector<16x1024xf32>
    %12 = arith.mulf %10, %11 : vector<16x1024xf32>
    %13 = arith.addf %7, %12 : vector<16x1024xf32>
    %14 = vector.extract_strided_slice %4 {offsets = [0, 1], sizes = [16, 1], strides = [1, 1]} : vector<16x8xf32> to vector<16x1xf32>
    %15 = vector.extract_strided_slice %3 {offsets = [1, 0], sizes = [1, 1024], strides = [1, 1]} : vector<8x1024xf32> to vector<1x1024xf32>
    %16 = vector.broadcast %14 : vector<16x1xf32> to vector<16x1024xf32>
    %17 = vector.broadcast %15 : vector<1x1024xf32> to vector<16x1024xf32>
    %18 = arith.mulf %16, %17 : vector<16x1024xf32>
    %19 = arith.addf %13, %18 : vector<16x1024xf32>
    %20 = vector.extract_strided_slice %4 {offsets = [0, 2], sizes = [16, 1], strides = [1, 1]} : vector<16x8xf32> to vector<16x1xf32>
    %21 = vector.extract_strided_slice %3 {offsets = [2, 0], sizes = [1, 1024], strides = [1, 1]} : vector<8x1024xf32> to vector<1x1024xf32>
    %22 = vector.broadcast %20 : vector<16x1xf32> to vector<16x1024xf32>
    %23 = vector.broadcast %21 : vector<1x1024xf32> to vector<16x1024xf32>
    %24 = arith.mulf %22, %23 : vector<16x1024xf32>
    %25 = arith.addf %19, %24 : vector<16x1024xf32>
    %26 = vector.extract_strided_slice %4 {offsets = [0, 3], sizes = [16, 1], strides = [1, 1]} : vector<16x8xf32> to vector<16x1xf32>
    %27 = vector.extract_strided_slice %3 {offsets = [3, 0], sizes = [1, 1024], strides = [1, 1]} : vector<8x1024xf32> to vector<1x1024xf32>
    %28 = vector.broadcast %26 : vector<16x1xf32> to vector<16x1024xf32>
    %29 = vector.broadcast %27 : vector<1x1024xf32> to vector<16x1024xf32>
    %30 = arith.mulf %28, %29 : vector<16x1024xf32>
    %31 = arith.addf %25, %30 : vector<16x1024xf32>
    %32 = vector.extract_strided_slice %4 {offsets = [0, 4], sizes = [16, 1], strides = [1, 1]} : vector<16x8xf32> to vector<16x1xf32>
    %33 = vector.extract_strided_slice %3 {offsets = [4, 0], sizes = [1, 1024], strides = [1, 1]} : vector<8x1024xf32> to vector<1x1024xf32>
    %34 = vector.broadcast %32 : vector<16x1xf32> to vector<16x1024xf32>
    %35 = vector.broadcast %33 : vector<1x1024xf32> to vector<16x1024xf32>
    %36 = arith.mulf %34, %35 : vector<16x1024xf32>
    %37 = arith.addf %31, %36 : vector<16x1024xf32>
    %38 = vector.extract_strided_slice %4 {offsets = [0, 5], sizes = [16, 1], strides = [1, 1]} : vector<16x8xf32> to vector<16x1xf32>
    %39 = vector.extract_strided_slice %3 {offsets = [5, 0], sizes = [1, 1024], strides = [1, 1]} : vector<8x1024xf32> to vector<1x1024xf32>
    %40 = vector.broadcast %38 : vector<16x1xf32> to vector<16x1024xf32>
    %41 = vector.broadcast %39 : vector<1x1024xf32> to vector<16x1024xf32>
    %42 = arith.mulf %40, %41 : vector<16x1024xf32>
    %43 = arith.addf %37, %42 : vector<16x1024xf32>
    %44 = vector.extract_strided_slice %4 {offsets = [0, 6], sizes = [16, 1], strides = [1, 1]} : vector<16x8xf32> to vector<16x1xf32>
    %45 = vector.extract_strided_slice %3 {offsets = [6, 0], sizes = [1, 1024], strides = [1, 1]} : vector<8x1024xf32> to vector<1x1024xf32>
    %46 = vector.broadcast %44 : vector<16x1xf32> to vector<16x1024xf32>
    %47 = vector.broadcast %45 : vector<1x1024xf32> to vector<16x1024xf32>
    %48 = arith.mulf %46, %47 : vector<16x1024xf32>
    %49 = arith.addf %43, %48 : vector<16x1024xf32>
    %50 = vector.extract_strided_slice %4 {offsets = [0, 7], sizes = [16, 1], strides = [1, 1]} : vector<16x8xf32> to vector<16x1xf32>
    %51 = vector.extract_strided_slice %3 {offsets = [7, 0], sizes = [1, 1024], strides = [1, 1]} : vector<8x1024xf32> to vector<1x1024xf32>
    %52 = vector.broadcast %50 : vector<16x1xf32> to vector<16x1024xf32>
    %53 = vector.broadcast %51 : vector<1x1024xf32> to vector<16x1024xf32>
    %54 = arith.mulf %52, %53 : vector<16x1024xf32>
    %55 = arith.addf %49, %54 : vector<16x1024xf32>
    %56 = arith.negf %55 : vector<16x1024xf32>
    %57 = math.exp %56 : vector<16x1024xf32>
    %cst = arith.constant 1.000000e+00 : f32
    %58 = vector.broadcast %cst : f32 to vector<16x1024xf32>
    %59 = arith.addf %58, %57 : vector<16x1024xf32>
    %60 = arith.divf %58, %59 : vector<16x1024xf32>
    %61 = arith.mulf %55, %60 : vector<16x1024xf32>
    %cst_4 = arith.constant 0.000000e+00 : f32
    %62 = vector.shape_cast %2 : vector<1x1024xi1> to vector<1x1024xi1>
    %63 = vector.broadcast %62 : vector<1x1024xi1> to vector<16x1024xi1>
    %64 = vector.broadcast %cst_4 : f32 to vector<16x1024xf32>
    %65 = arith.select %63, %61, %64 : vector<16x1024xi1>, vector<16x1024xf32>
    %cst_5 = arith.constant dense<0.000000e+00> : vector<16xf32>
    %66 = vector.multi_reduction <add>, %65, %cst_5 [1] : vector<16x1024xf32> to vector<16xf32>
    %67 = vector.shape_cast %66 : vector<16xf32> to vector<16x1xf32>
    %cst_6 = arith.constant 1.000000e-03 : f32
    %68 = vector.broadcast %cst_6 : f32 to vector<16x1xf32>
    %69 = arith.mulf %67, %68 : vector<16x1xf32>
    %70 = vector.broadcast %69 : vector<16x1xf32> to vector<16x1024xf32>
    %71 = arith.subf %61, %70 : vector<16x1024xf32>
    %cst_7 = arith.constant 0.000000e+00 : f32
    %72 = vector.shape_cast %2 : vector<1x1024xi1> to vector<1x1024xi1>
    %73 = vector.broadcast %72 : vector<1x1024xi1> to vector<16x1024xi1>
    %74 = vector.broadcast %cst_7 : f32 to vector<16x1024xf32>
    %75 = arith.select %73, %71, %74 : vector<16x1024xi1>, vector<16x1024xf32>
    %76 = arith.mulf %75, %75 : vector<16x1024xf32>
    %cst_8 = arith.constant dense<0.000000e+00> : vector<16xf32>
    %77 = vector.multi_reduction <add>, %76, %cst_8 [1] : vector<16x1024xf32> to vector<16xf32>
    %78 = vector.shape_cast %77 : vector<16xf32> to vector<16x1xf32>
    %cst_9 = arith.constant 1.000000e-03 : f32
    %79 = vector.broadcast %cst_9 : f32 to vector<16x1xf32>
    %80 = arith.mulf %78, %79 : vector<16x1xf32>
    %c16_10 = arith.constant 16 : index
    %c1 = arith.constant 1 : index
    %81 = vector.load %arg0[%c16_10, %c1] : memref<80x16xf32, #tpu.memory_space<vmem>>, vector<16x1xf32>
    %c16_11 = arith.constant 16 : index
    %c2 = arith.constant 2 : index
    %82 = vector.load %arg0[%c16_11, %c2] : memref<80x16xf32, #tpu.memory_space<vmem>>, vector<16x1xf32>
    %cst_12 = arith.constant 9.99999974E-6 : f32
    %83 = vector.broadcast %cst_12 : f32 to vector<16x1xf32>
    %84 = arith.addf %80, %83 : vector<16x1xf32>
    %85 = math.rsqrt %84 : vector<16x1xf32>
    %86 = arith.mulf %81, %85 : vector<16x1xf32>
    %87 = vector.broadcast %69 : vector<16x1xf32> to vector<16x1024xf32>
    %88 = arith.subf %61, %87 : vector<16x1024xf32>
    %89 = vector.broadcast %86 : vector<16x1xf32> to vector<16x1024xf32>
    %90 = arith.mulf %89, %88 : vector<16x1024xf32>
    %91 = vector.broadcast %82 : vector<16x1xf32> to vector<16x1024xf32>
    %92 = arith.addf %90, %91 : vector<16x1024xf32>
    %c32 = arith.constant 32 : index
    %c0_13 = arith.constant 0 : index
    %93 = vector.load %arg0[%c32, %c0_13] : memref<80x16xf32, #tpu.memory_space<vmem>>, vector<8x16xf32>
    %c40 = arith.constant 40 : index
    %c0_14 = arith.constant 0 : index
    %94 = vector.load %arg0[%c40, %c0_14] : memref<80x16xf32, #tpu.memory_space<vmem>>, vector<8x1xf32>
    %95 = vector.shape_cast %94 : vector<8x1xf32> to vector<8x1xf32>
    %96 = vector.broadcast %95 : vector<8x1xf32> to vector<8x1024xf32>
    %97 = vector.extract_strided_slice %93 {offsets = [0, 0], sizes = [8, 1], strides = [1, 1]} : vector<8x16xf32> to vector<8x1xf32>
    %98 = vector.extract_strided_slice %92 {offsets = [0, 0], sizes = [1, 1024], strides = [1, 1]} : vector<16x1024xf32> to vector<1x1024xf32>
    %99 = vector.broadcast %97 : vector<8x1xf32> to vector<8x1024xf32>
    %100 = vector.broadcast %98 : vector<1x1024xf32> to vector<8x1024xf32>
    %101 = arith.mulf %99, %100 : vector<8x1024xf32>
    %102 = arith.addf %96, %101 : vector<8x1024xf32>
    %103 = vector.extract_strided_slice %93 {offsets = [0, 1], sizes = [8, 1], strides = [1, 1]} : vector<8x16xf32> to vector<8x1xf32>
    %104 = vector.extract_strided_slice %92 {offsets = [1, 0], sizes = [1, 1024], strides = [1, 1]} : vector<16x1024xf32> to vector<1x1024xf32>
    %105 = vector.broadcast %103 : vector<8x1xf32> to vector<8x1024xf32>
    %106 = vector.broadcast %104 : vector<1x1024xf32> to vector<8x1024xf32>
    %107 = arith.mulf %105, %106 : vector<8x1024xf32>
    %108 = arith.addf %102, %107 : vector<8x1024xf32>
    %109 = vector.extract_strided_slice %93 {offsets = [0, 2], sizes = [8, 1], strides = [1, 1]} : vector<8x16xf32> to vector<8x1xf32>
    %110 = vector.extract_strided_slice %92 {offsets = [2, 0], sizes = [1, 1024], strides = [1, 1]} : vector<16x1024xf32> to vector<1x1024xf32>
    %111 = vector.broadcast %109 : vector<8x1xf32> to vector<8x1024xf32>
    %112 = vector.broadcast %110 : vector<1x1024xf32> to vector<8x1024xf32>
    %113 = arith.mulf %111, %112 : vector<8x1024xf32>
    %114 = arith.addf %108, %113 : vector<8x1024xf32>
    %115 = vector.extract_strided_slice %93 {offsets = [0, 3], sizes = [8, 1], strides = [1, 1]} : vector<8x16xf32> to vector<8x1xf32>
    %116 = vector.extract_strided_slice %92 {offsets = [3, 0], sizes = [1, 1024], strides = [1, 1]} : vector<16x1024xf32> to vector<1x1024xf32>
    %117 = vector.broadcast %115 : vector<8x1xf32> to vector<8x1024xf32>
    %118 = vector.broadcast %116 : vector<1x1024xf32> to vector<8x1024xf32>
    %119 = arith.mulf %117, %118 : vector<8x1024xf32>
    %120 = arith.addf %114, %119 : vector<8x1024xf32>
    %121 = vector.extract_strided_slice %93 {offsets = [0, 4], sizes = [8, 1], strides = [1, 1]} : vector<8x16xf32> to vector<8x1xf32>
    %122 = vector.extract_strided_slice %92 {offsets = [4, 0], sizes = [1, 1024], strides = [1, 1]} : vector<16x1024xf32> to vector<1x1024xf32>
    %123 = vector.broadcast %121 : vector<8x1xf32> to vector<8x1024xf32>
    %124 = vector.broadcast %122 : vector<1x1024xf32> to vector<8x1024xf32>
    %125 = arith.mulf %123, %124 : vector<8x1024xf32>
    %126 = arith.addf %120, %125 : vector<8x1024xf32>
    %127 = vector.extract_strided_slice %93 {offsets = [0, 5], sizes = [8, 1], strides = [1, 1]} : vector<8x16xf32> to vector<8x1xf32>
    %128 = vector.extract_strided_slice %92 {offsets = [5, 0], sizes = [1, 1024], strides = [1, 1]} : vector<16x1024xf32> to vector<1x1024xf32>
    %129 = vector.broadcast %127 : vector<8x1xf32> to vector<8x1024xf32>
    %130 = vector.broadcast %128 : vector<1x1024xf32> to vector<8x1024xf32>
    %131 = arith.mulf %129, %130 : vector<8x1024xf32>
    %132 = arith.addf %126, %131 : vector<8x1024xf32>
    %133 = vector.extract_strided_slice %93 {offsets = [0, 6], sizes = [8, 1], strides = [1, 1]} : vector<8x16xf32> to vector<8x1xf32>
    %134 = vector.extract_strided_slice %92 {offsets = [6, 0], sizes = [1, 1024], strides = [1, 1]} : vector<16x1024xf32> to vector<1x1024xf32>
    %135 = vector.broadcast %133 : vector<8x1xf32> to vector<8x1024xf32>
    %136 = vector.broadcast %134 : vector<1x1024xf32> to vector<8x1024xf32>
    %137 = arith.mulf %135, %136 : vector<8x1024xf32>
    %138 = arith.addf %132, %137 : vector<8x1024xf32>
    %139 = vector.extract_strided_slice %93 {offsets = [0, 7], sizes = [8, 1], strides = [1, 1]} : vector<8x16xf32> to vector<8x1xf32>
    %140 = vector.extract_strided_slice %92 {offsets = [7, 0], sizes = [1, 1024], strides = [1, 1]} : vector<16x1024xf32> to vector<1x1024xf32>
    %141 = vector.broadcast %139 : vector<8x1xf32> to vector<8x1024xf32>
    %142 = vector.broadcast %140 : vector<1x1024xf32> to vector<8x1024xf32>
    %143 = arith.mulf %141, %142 : vector<8x1024xf32>
    %144 = arith.addf %138, %143 : vector<8x1024xf32>
    %145 = vector.extract_strided_slice %93 {offsets = [0, 8], sizes = [8, 1], strides = [1, 1]} : vector<8x16xf32> to vector<8x1xf32>
    %146 = vector.extract_strided_slice %92 {offsets = [8, 0], sizes = [1, 1024], strides = [1, 1]} : vector<16x1024xf32> to vector<1x1024xf32>
    %147 = vector.broadcast %145 : vector<8x1xf32> to vector<8x1024xf32>
    %148 = vector.broadcast %146 : vector<1x1024xf32> to vector<8x1024xf32>
    %149 = arith.mulf %147, %148 : vector<8x1024xf32>
    %150 = arith.addf %144, %149 : vector<8x1024xf32>
    %151 = vector.extract_strided_slice %93 {offsets = [0, 9], sizes = [8, 1], strides = [1, 1]} : vector<8x16xf32> to vector<8x1xf32>
    %152 = vector.extract_strided_slice %92 {offsets = [9, 0], sizes = [1, 1024], strides = [1, 1]} : vector<16x1024xf32> to vector<1x1024xf32>
    %153 = vector.broadcast %151 : vector<8x1xf32> to vector<8x1024xf32>
    %154 = vector.broadcast %152 : vector<1x1024xf32> to vector<8x1024xf32>
    %155 = arith.mulf %153, %154 : vector<8x1024xf32>
    %156 = arith.addf %150, %155 : vector<8x1024xf32>
    %157 = vector.extract_strided_slice %93 {offsets = [0, 10], sizes = [8, 1], strides = [1, 1]} : vector<8x16xf32> to vector<8x1xf32>
    %158 = vector.extract_strided_slice %92 {offsets = [10, 0], sizes = [1, 1024], strides = [1, 1]} : vector<16x1024xf32> to vector<1x1024xf32>
    %159 = vector.broadcast %157 : vector<8x1xf32> to vector<8x1024xf32>
    %160 = vector.broadcast %158 : vector<1x1024xf32> to vector<8x1024xf32>
    %161 = arith.mulf %159, %160 : vector<8x1024xf32>
    %162 = arith.addf %156, %161 : vector<8x1024xf32>
    %163 = vector.extract_strided_slice %93 {offsets = [0, 11], sizes = [8, 1], strides = [1, 1]} : vector<8x16xf32> to vector<8x1xf32>
    %164 = vector.extract_strided_slice %92 {offsets = [11, 0], sizes = [1, 1024], strides = [1, 1]} : vector<16x1024xf32> to vector<1x1024xf32>
    %165 = vector.broadcast %163 : vector<8x1xf32> to vector<8x1024xf32>
    %166 = vector.broadcast %164 : vector<1x1024xf32> to vector<8x1024xf32>
    %167 = arith.mulf %165, %166 : vector<8x1024xf32>
    %168 = arith.addf %162, %167 : vector<8x1024xf32>
    %169 = vector.extract_strided_slice %93 {offsets = [0, 12], sizes = [8, 1], strides = [1, 1]} : vector<8x16xf32> to vector<8x1xf32>
    %170 = vector.extract_strided_slice %92 {offsets = [12, 0], sizes = [1, 1024], strides = [1, 1]} : vector<16x1024xf32> to vector<1x1024xf32>
    %171 = vector.broadcast %169 : vector<8x1xf32> to vector<8x1024xf32>
    %172 = vector.broadcast %170 : vector<1x1024xf32> to vector<8x1024xf32>
    %173 = arith.mulf %171, %172 : vector<8x1024xf32>
    %174 = arith.addf %168, %173 : vector<8x1024xf32>
    %175 = vector.extract_strided_slice %93 {offsets = [0, 13], sizes = [8, 1], strides = [1, 1]} : vector<8x16xf32> to vector<8x1xf32>
    %176 = vector.extract_strided_slice %92 {offsets = [13, 0], sizes = [1, 1024], strides = [1, 1]} : vector<16x1024xf32> to vector<1x1024xf32>
    %177 = vector.broadcast %175 : vector<8x1xf32> to vector<8x1024xf32>
    %178 = vector.broadcast %176 : vector<1x1024xf32> to vector<8x1024xf32>
    %179 = arith.mulf %177, %178 : vector<8x1024xf32>
    %180 = arith.addf %174, %179 : vector<8x1024xf32>
    %181 = vector.extract_strided_slice %93 {offsets = [0, 14], sizes = [8, 1], strides = [1, 1]} : vector<8x16xf32> to vector<8x1xf32>
    %182 = vector.extract_strided_slice %92 {offsets = [14, 0], sizes = [1, 1024], strides = [1, 1]} : vector<16x1024xf32> to vector<1x1024xf32>
    %183 = vector.broadcast %181 : vector<8x1xf32> to vector<8x1024xf32>
    %184 = vector.broadcast %182 : vector<1x1024xf32> to vector<8x1024xf32>
    %185 = arith.mulf %183, %184 : vector<8x1024xf32>
    %186 = arith.addf %180, %185 : vector<8x1024xf32>
    %187 = vector.extract_strided_slice %93 {offsets = [0, 15], sizes = [8, 1], strides = [1, 1]} : vector<8x16xf32> to vector<8x1xf32>
    %188 = vector.extract_strided_slice %92 {offsets = [15, 0], sizes = [1, 1024], strides = [1, 1]} : vector<16x1024xf32> to vector<1x1024xf32>
    %189 = vector.broadcast %187 : vector<8x1xf32> to vector<8x1024xf32>
    %190 = vector.broadcast %188 : vector<1x1024xf32> to vector<8x1024xf32>
    %191 = arith.mulf %189, %190 : vector<8x1024xf32>
    %192 = arith.addf %186, %191 : vector<8x1024xf32>
    %193 = arith.negf %192 : vector<8x1024xf32>
    %194 = math.exp %193 : vector<8x1024xf32>
    %cst_15 = arith.constant 1.000000e+00 : f32
    %195 = vector.broadcast %cst_15 : f32 to vector<8x1024xf32>
    %196 = arith.addf %195, %194 : vector<8x1024xf32>
    %197 = arith.divf %195, %196 : vector<8x1024xf32>
    %198 = arith.mulf %192, %197 : vector<8x1024xf32>
    %cst_16 = arith.constant 0.000000e+00 : f32
    %199 = vector.shape_cast %2 : vector<1x1024xi1> to vector<1x1024xi1>
    %200 = vector.broadcast %199 : vector<1x1024xi1> to vector<8x1024xi1>
    %201 = vector.broadcast %cst_16 : f32 to vector<8x1024xf32>
    %202 = arith.select %200, %198, %201 : vector<8x1024xi1>, vector<8x1024xf32>
    %cst_17 = arith.constant dense<0.000000e+00> : vector<8xf32>
    %203 = vector.multi_reduction <add>, %202, %cst_17 [1] : vector<8x1024xf32> to vector<8xf32>
    %204 = vector.shape_cast %203 : vector<8xf32> to vector<8x1xf32>
    %cst_18 = arith.constant 1.000000e-03 : f32
    %205 = vector.broadcast %cst_18 : f32 to vector<8x1xf32>
    %206 = arith.mulf %204, %205 : vector<8x1xf32>
    %207 = vector.broadcast %206 : vector<8x1xf32> to vector<8x1024xf32>
    %208 = arith.subf %198, %207 : vector<8x1024xf32>
    %cst_19 = arith.constant 0.000000e+00 : f32
    %209 = vector.shape_cast %2 : vector<1x1024xi1> to vector<1x1024xi1>
    %210 = vector.broadcast %209 : vector<1x1024xi1> to vector<8x1024xi1>
    %211 = vector.broadcast %cst_19 : f32 to vector<8x1024xf32>
    %212 = arith.select %210, %208, %211 : vector<8x1024xi1>, vector<8x1024xf32>
    %213 = arith.mulf %212, %212 : vector<8x1024xf32>
    %cst_20 = arith.constant dense<0.000000e+00> : vector<8xf32>
    %214 = vector.multi_reduction <add>, %213, %cst_20 [1] : vector<8x1024xf32> to vector<8xf32>
    %215 = vector.shape_cast %214 : vector<8xf32> to vector<8x1xf32>
    %cst_21 = arith.constant 1.000000e-03 : f32
    %216 = vector.broadcast %cst_21 : f32 to vector<8x1xf32>
    %217 = arith.mulf %215, %216 : vector<8x1xf32>
    %c40_22 = arith.constant 40 : index
    %c1_23 = arith.constant 1 : index
    %218 = vector.load %arg0[%c40_22, %c1_23] : memref<80x16xf32, #tpu.memory_space<vmem>>, vector<8x1xf32>
    %c40_24 = arith.constant 40 : index
    %c2_25 = arith.constant 2 : index
    %219 = vector.load %arg0[%c40_24, %c2_25] : memref<80x16xf32, #tpu.memory_space<vmem>>, vector<8x1xf32>
    %cst_26 = arith.constant 9.99999974E-6 : f32
    %220 = vector.broadcast %cst_26 : f32 to vector<8x1xf32>
    %221 = arith.addf %217, %220 : vector<8x1xf32>
    %222 = math.rsqrt %221 : vector<8x1xf32>
    %223 = arith.mulf %218, %222 : vector<8x1xf32>
    %224 = vector.broadcast %206 : vector<8x1xf32> to vector<8x1024xf32>
    %225 = arith.subf %198, %224 : vector<8x1024xf32>
    %226 = vector.broadcast %223 : vector<8x1xf32> to vector<8x1024xf32>
    %227 = arith.mulf %226, %225 : vector<8x1024xf32>
    %228 = vector.broadcast %219 : vector<8x1xf32> to vector<8x1024xf32>
    %229 = arith.addf %227, %228 : vector<8x1024xf32>
    %c48 = arith.constant 48 : index
    %c0_27 = arith.constant 0 : index
    %230 = vector.load %arg0[%c48, %c0_27] : memref<80x16xf32, #tpu.memory_space<vmem>>, vector<4x8xf32>
    %c56 = arith.constant 56 : index
    %c0_28 = arith.constant 0 : index
    %231 = vector.load %arg0[%c56, %c0_28] : memref<80x16xf32, #tpu.memory_space<vmem>>, vector<4x1xf32>
    %232 = vector.shape_cast %231 : vector<4x1xf32> to vector<4x1xf32>
    %233 = vector.broadcast %232 : vector<4x1xf32> to vector<4x1024xf32>
    %234 = vector.extract_strided_slice %230 {offsets = [0, 0], sizes = [4, 1], strides = [1, 1]} : vector<4x8xf32> to vector<4x1xf32>
    %235 = vector.extract_strided_slice %229 {offsets = [0, 0], sizes = [1, 1024], strides = [1, 1]} : vector<8x1024xf32> to vector<1x1024xf32>
    %236 = vector.broadcast %234 : vector<4x1xf32> to vector<4x1024xf32>
    %237 = vector.broadcast %235 : vector<1x1024xf32> to vector<4x1024xf32>
    %238 = arith.mulf %236, %237 : vector<4x1024xf32>
    %239 = arith.addf %233, %238 : vector<4x1024xf32>
    %240 = vector.extract_strided_slice %230 {offsets = [0, 1], sizes = [4, 1], strides = [1, 1]} : vector<4x8xf32> to vector<4x1xf32>
    %241 = vector.extract_strided_slice %229 {offsets = [1, 0], sizes = [1, 1024], strides = [1, 1]} : vector<8x1024xf32> to vector<1x1024xf32>
    %242 = vector.broadcast %240 : vector<4x1xf32> to vector<4x1024xf32>
    %243 = vector.broadcast %241 : vector<1x1024xf32> to vector<4x1024xf32>
    %244 = arith.mulf %242, %243 : vector<4x1024xf32>
    %245 = arith.addf %239, %244 : vector<4x1024xf32>
    %246 = vector.extract_strided_slice %230 {offsets = [0, 2], sizes = [4, 1], strides = [1, 1]} : vector<4x8xf32> to vector<4x1xf32>
    %247 = vector.extract_strided_slice %229 {offsets = [2, 0], sizes = [1, 1024], strides = [1, 1]} : vector<8x1024xf32> to vector<1x1024xf32>
    %248 = vector.broadcast %246 : vector<4x1xf32> to vector<4x1024xf32>
    %249 = vector.broadcast %247 : vector<1x1024xf32> to vector<4x1024xf32>
    %250 = arith.mulf %248, %249 : vector<4x1024xf32>
    %251 = arith.addf %245, %250 : vector<4x1024xf32>
    %252 = vector.extract_strided_slice %230 {offsets = [0, 3], sizes = [4, 1], strides = [1, 1]} : vector<4x8xf32> to vector<4x1xf32>
    %253 = vector.extract_strided_slice %229 {offsets = [3, 0], sizes = [1, 1024], strides = [1, 1]} : vector<8x1024xf32> to vector<1x1024xf32>
    %254 = vector.broadcast %252 : vector<4x1xf32> to vector<4x1024xf32>
    %255 = vector.broadcast %253 : vector<1x1024xf32> to vector<4x1024xf32>
    %256 = arith.mulf %254, %255 : vector<4x1024xf32>
    %257 = arith.addf %251, %256 : vector<4x1024xf32>
    %258 = vector.extract_strided_slice %230 {offsets = [0, 4], sizes = [4, 1], strides = [1, 1]} : vector<4x8xf32> to vector<4x1xf32>
    %259 = vector.extract_strided_slice %229 {offsets = [4, 0], sizes = [1, 1024], strides = [1, 1]} : vector<8x1024xf32> to vector<1x1024xf32>
    %260 = vector.broadcast %258 : vector<4x1xf32> to vector<4x1024xf32>
    %261 = vector.broadcast %259 : vector<1x1024xf32> to vector<4x1024xf32>
    %262 = arith.mulf %260, %261 : vector<4x1024xf32>
    %263 = arith.addf %257, %262 : vector<4x1024xf32>
    %264 = vector.extract_strided_slice %230 {offsets = [0, 5], sizes = [4, 1], strides = [1, 1]} : vector<4x8xf32> to vector<4x1xf32>
    %265 = vector.extract_strided_slice %229 {offsets = [5, 0], sizes = [1, 1024], strides = [1, 1]} : vector<8x1024xf32> to vector<1x1024xf32>
    %266 = vector.broadcast %264 : vector<4x1xf32> to vector<4x1024xf32>
    %267 = vector.broadcast %265 : vector<1x1024xf32> to vector<4x1024xf32>
    %268 = arith.mulf %266, %267 : vector<4x1024xf32>
    %269 = arith.addf %263, %268 : vector<4x1024xf32>
    %270 = vector.extract_strided_slice %230 {offsets = [0, 6], sizes = [4, 1], strides = [1, 1]} : vector<4x8xf32> to vector<4x1xf32>
    %271 = vector.extract_strided_slice %229 {offsets = [6, 0], sizes = [1, 1024], strides = [1, 1]} : vector<8x1024xf32> to vector<1x1024xf32>
    %272 = vector.broadcast %270 : vector<4x1xf32> to vector<4x1024xf32>
    %273 = vector.broadcast %271 : vector<1x1024xf32> to vector<4x1024xf32>
    %274 = arith.mulf %272, %273 : vector<4x1024xf32>
    %275 = arith.addf %269, %274 : vector<4x1024xf32>
    %276 = vector.extract_strided_slice %230 {offsets = [0, 7], sizes = [4, 1], strides = [1, 1]} : vector<4x8xf32> to vector<4x1xf32>
    %277 = vector.extract_strided_slice %229 {offsets = [7, 0], sizes = [1, 1024], strides = [1, 1]} : vector<8x1024xf32> to vector<1x1024xf32>
    %278 = vector.broadcast %276 : vector<4x1xf32> to vector<4x1024xf32>
    %279 = vector.broadcast %277 : vector<1x1024xf32> to vector<4x1024xf32>
    %280 = arith.mulf %278, %279 : vector<4x1024xf32>
    %281 = arith.addf %275, %280 : vector<4x1024xf32>
    %282 = arith.negf %281 : vector<4x1024xf32>
    %283 = math.exp %282 : vector<4x1024xf32>
    %cst_29 = arith.constant 1.000000e+00 : f32
    %284 = vector.broadcast %cst_29 : f32 to vector<4x1024xf32>
    %285 = arith.addf %284, %283 : vector<4x1024xf32>
    %286 = arith.divf %284, %285 : vector<4x1024xf32>
    %287 = arith.mulf %281, %286 : vector<4x1024xf32>
    %cst_30 = arith.constant 0.000000e+00 : f32
    %288 = vector.shape_cast %2 : vector<1x1024xi1> to vector<1x1024xi1>
    %289 = vector.broadcast %288 : vector<1x1024xi1> to vector<4x1024xi1>
    %290 = vector.broadcast %cst_30 : f32 to vector<4x1024xf32>
    %291 = arith.select %289, %287, %290 : vector<4x1024xi1>, vector<4x1024xf32>
    %cst_31 = arith.constant dense<0.000000e+00> : vector<4xf32>
    %292 = vector.multi_reduction <add>, %291, %cst_31 [1] : vector<4x1024xf32> to vector<4xf32>
    %293 = vector.shape_cast %292 : vector<4xf32> to vector<4x1xf32>
    %cst_32 = arith.constant 1.000000e-03 : f32
    %294 = vector.broadcast %cst_32 : f32 to vector<4x1xf32>
    %295 = arith.mulf %293, %294 : vector<4x1xf32>
    %296 = vector.broadcast %295 : vector<4x1xf32> to vector<4x1024xf32>
    %297 = arith.subf %287, %296 : vector<4x1024xf32>
    %cst_33 = arith.constant 0.000000e+00 : f32
    %298 = vector.shape_cast %2 : vector<1x1024xi1> to vector<1x1024xi1>
    %299 = vector.broadcast %298 : vector<1x1024xi1> to vector<4x1024xi1>
    %300 = vector.broadcast %cst_33 : f32 to vector<4x1024xf32>
    %301 = arith.select %299, %297, %300 : vector<4x1024xi1>, vector<4x1024xf32>
    %302 = arith.mulf %301, %301 : vector<4x1024xf32>
    %cst_34 = arith.constant dense<0.000000e+00> : vector<4xf32>
    %303 = vector.multi_reduction <add>, %302, %cst_34 [1] : vector<4x1024xf32> to vector<4xf32>
    %304 = vector.shape_cast %303 : vector<4xf32> to vector<4x1xf32>
    %cst_35 = arith.constant 1.000000e-03 : f32
    %305 = vector.broadcast %cst_35 : f32 to vector<4x1xf32>
    %306 = arith.mulf %304, %305 : vector<4x1xf32>
    %c56_36 = arith.constant 56 : index
    %c1_37 = arith.constant 1 : index
    %307 = vector.load %arg0[%c56_36, %c1_37] : memref<80x16xf32, #tpu.memory_space<vmem>>, vector<4x1xf32>
    %c56_38 = arith.constant 56 : index
    %c2_39 = arith.constant 2 : index
    %308 = vector.load %arg0[%c56_38, %c2_39] : memref<80x16xf32, #tpu.memory_space<vmem>>, vector<4x1xf32>
    %cst_40 = arith.constant 9.99999974E-6 : f32
    %309 = vector.broadcast %cst_40 : f32 to vector<4x1xf32>
    %310 = arith.addf %306, %309 : vector<4x1xf32>
    %311 = math.rsqrt %310 : vector<4x1xf32>
    %312 = arith.mulf %307, %311 : vector<4x1xf32>
    %313 = vector.broadcast %295 : vector<4x1xf32> to vector<4x1024xf32>
    %314 = arith.subf %287, %313 : vector<4x1024xf32>
    %315 = vector.broadcast %312 : vector<4x1xf32> to vector<4x1024xf32>
    %316 = arith.mulf %315, %314 : vector<4x1024xf32>
    %317 = vector.broadcast %308 : vector<4x1xf32> to vector<4x1024xf32>
    %318 = arith.addf %316, %317 : vector<4x1024xf32>
    %c64 = arith.constant 64 : index
    %c0_41 = arith.constant 0 : index
    %319 = vector.load %arg0[%c64, %c0_41] : memref<80x16xf32, #tpu.memory_space<vmem>>, vector<1x4xf32>
    %c72 = arith.constant 72 : index
    %c0_42 = arith.constant 0 : index
    %320 = vector.load %arg0[%c72, %c0_42] : memref<80x16xf32, #tpu.memory_space<vmem>>, vector<1x1xf32>
    %321 = vector.shape_cast %320 : vector<1x1xf32> to vector<1x1xf32>
    %322 = vector.broadcast %321 : vector<1x1xf32> to vector<1x1024xf32>
    %323 = vector.extract_strided_slice %319 {offsets = [0, 0], sizes = [1, 1], strides = [1, 1]} : vector<1x4xf32> to vector<1x1xf32>
    %324 = vector.extract_strided_slice %318 {offsets = [0, 0], sizes = [1, 1024], strides = [1, 1]} : vector<4x1024xf32> to vector<1x1024xf32>
    %325 = vector.broadcast %323 : vector<1x1xf32> to vector<1x1024xf32>
    %326 = arith.mulf %325, %324 : vector<1x1024xf32>
    %327 = arith.addf %322, %326 : vector<1x1024xf32>
    %328 = vector.extract_strided_slice %319 {offsets = [0, 1], sizes = [1, 1], strides = [1, 1]} : vector<1x4xf32> to vector<1x1xf32>
    %329 = vector.extract_strided_slice %318 {offsets = [1, 0], sizes = [1, 1024], strides = [1, 1]} : vector<4x1024xf32> to vector<1x1024xf32>
    %330 = vector.broadcast %328 : vector<1x1xf32> to vector<1x1024xf32>
    %331 = arith.mulf %330, %329 : vector<1x1024xf32>
    %332 = arith.addf %327, %331 : vector<1x1024xf32>
    %333 = vector.extract_strided_slice %319 {offsets = [0, 2], sizes = [1, 1], strides = [1, 1]} : vector<1x4xf32> to vector<1x1xf32>
    %334 = vector.extract_strided_slice %318 {offsets = [2, 0], sizes = [1, 1024], strides = [1, 1]} : vector<4x1024xf32> to vector<1x1024xf32>
    %335 = vector.broadcast %333 : vector<1x1xf32> to vector<1x1024xf32>
    %336 = arith.mulf %335, %334 : vector<1x1024xf32>
    %337 = arith.addf %332, %336 : vector<1x1024xf32>
    %338 = vector.extract_strided_slice %319 {offsets = [0, 3], sizes = [1, 1], strides = [1, 1]} : vector<1x4xf32> to vector<1x1xf32>
    %339 = vector.extract_strided_slice %318 {offsets = [3, 0], sizes = [1, 1024], strides = [1, 1]} : vector<4x1024xf32> to vector<1x1024xf32>
    %340 = vector.broadcast %338 : vector<1x1xf32> to vector<1x1024xf32>
    %341 = arith.mulf %340, %339 : vector<1x1024xf32>
    %342 = arith.addf %337, %341 : vector<1x1024xf32>
    %343 = arith.negf %342 : vector<1x1024xf32>
    %344 = math.exp %343 : vector<1x1024xf32>
    %cst_43 = arith.constant 1.000000e+00 : f32
    %345 = vector.broadcast %cst_43 : f32 to vector<1x1024xf32>
    %346 = arith.addf %345, %344 : vector<1x1024xf32>
    %347 = arith.divf %345, %346 : vector<1x1024xf32>
    %c0_44 = arith.constant 0 : index
    %c0_45 = arith.constant 0 : index
    %348 = vector.load %arg2[%c0_44, %c0_45] : memref<1x1024xf32, #tpu.memory_space<vmem>>, vector<1x1024xf32>
    tpu.vector_store %arg2[%c0_44, %c0_45], %347 {strides = array<i32>} : memref<1x1024xf32, #tpu.memory_space<vmem>>, vector<1x1024xf32>,
    return
  }
}

</mosaic_0001>

<llo_original>
// kernel: network_forward.1
$region0: #{network_forward.1}
  #allocation0 [shape = 'u32[]', space=smem, size = 0x4, offset = 0x4, fixed_abs, tag = 'smem constant byte address 0x4 - core index']
  #allocation1 [shape = 'u32[72,128]{1,0:T(1,128)}', space=vmem, size = 0x9000, scoped, tag = 'internal scratch']
  %s0 = inlined_call_operand.vmem [shape: f32[80,16], index: 0, kind: input, shape index: {}]
  %s1 = inlined_call_operand.vmem [shape: f32[8,1024], index: 1, kind: input, shape index: {}]
  %s2 = inlined_call_operand.vmem [shape: f32[1,1024], index: 2, kind: output, shape index: {}]
  %s3 = sld [smem:[#allocation0]]
  $region18: #{network_forward.1} parent=0
    _
  %s5 = ssub.s32 1, %s3
  %s6 = scalar_select 0, %s5, %s3
  // Predicated region
  $region2: #{network_forward.1} parent=0 // pred_check
    _
  $region3: #{network_forward.1} parent=0 // pred_check_branch
    %8 = sbr.rel (0) target = $region5
  $region4: #{network_forward.1} parent=0 // pred_region
    _
  $region5: #{network_forward.1} parent=0 // pred_fallthru
    _
  // Predicated region
  $region6: #{network_forward.1} parent=0 // pred_check
    _
  $region7: #{network_forward.1} parent=0 // pred_check_branch
    %10 = sbr.rel (0) target = $region9
  $region8: #{network_forward.1} parent=0 // pred_region
    _
  $region9: #{network_forward.1} parent=0 // pred_fallthru
    _
  %v11 = vlaneseq
  %v12 = vand.u32 %v11, 127
  %v13 = vadd.s32 %v12, 128
  %v14 = vadd.s32 %v12, 256
  %v15 = vadd.s32 %v12, 384
  %v16 = vadd.s32 %v12, 512
  %v17 = vadd.s32 %v12, 640
  %v18 = vadd.s32 %v12, 768
  %v19 = vadd.s32 %v12, 896
  %vm20 = vcmp.lt.s32.totalorder %v12, 1000
  %vm21 = vcmp.lt.s32.totalorder %v13, 1000
  %vm22 = vcmp.lt.s32.totalorder %v14, 1000
  %vm23 = vcmp.lt.s32.totalorder %v15, 1000
  %vm24 = vcmp.lt.s32.totalorder %v16, 1000
  %vm25 = vcmp.lt.s32.totalorder %v17, 1000
  %vm26 = vcmp.lt.s32.totalorder %v18, 1000
  %vm27 = vcmp.lt.s32.totalorder %v19, 1000
  %v28 = vld [vmem:[%s1] sm:$0xff]
  %v29 = vld [vmem:[%s1 + $0x8] sm:$0xff]
  %v30 = vld [vmem:[%s1 + $0x10] sm:$0xff]
  %v31 = vld [vmem:[%s1 + $0x18] sm:$0xff]
  %v32 = vld [vmem:[%s1 + $0x20] sm:$0xff]
  %v33 = vld [vmem:[%s1 + $0x28] sm:$0xff]
  %v34 = vld [vmem:[%s1 + $0x30] sm:$0xff]
  %v35 = vld [vmem:[%s1 + $0x38] sm:$0xff]
  %v36 = vld [vmem:[%s0] sm:$0xff]
  %v37 = vld [vmem:[%s0 + $0x8] sm:$0xff]
  %v38 = vld [vmem:[%s0 + $0x10] sm:$0xff]
  %v39 = vld [vmem:[%s0 + $0x18] sm:$0xff]
  %41 = vset.pattern.permute.xlu0 0
  %42 = vperm.xlu0 %41, %v38
  %v43 = vpop.permute.xlu0 %42
  %46 = vset.pattern.permute.xlu0 0
  %47 = vperm.xlu0 %46, %v39
  %v48 = vpop.permute.xlu0 %47
  %51 = vset.pattern.permute.xlu0 0
  %52 = vperm.xlu0 %51, %v36
  %v53 = vpop.permute.xlu0 %52
  %56 = vset.pattern.permute.xlu0 0
  %57 = vperm.xlu0 %56, %v37
  %v58 = vpop.permute.xlu0 %57
  %v60 = vperm.slane %v28, 0
  %v61 = vperm.slane %v29, 0
  %v62 = vperm.slane %v30, 0
  %v63 = vperm.slane %v31, 0
  %v64 = vperm.slane %v32, 0
  %v65 = vperm.slane %v33, 0
  %v66 = vperm.slane %v34, 0
  %v67 = vperm.slane %v35, 0
  %v68 = vmul.f32 %v53, %v60
  %v69 = vmul.f32 %v53, %v61
  %v70 = vmul.f32 %v53, %v62
  %v71 = vmul.f32 %v53, %v63
  %v72 = vmul.f32 %v53, %v64
  %v73 = vmul.f32 %v53, %v65
  %v74 = vmul.f32 %v53, %v66
  %v75 = vmul.f32 %v53, %v67
  %v76 = vmul.f32 %v58, %v60
  %v77 = vmul.f32 %v58, %v61
  %v78 = vmul.f32 %v58, %v62
  %v79 = vmul.f32 %v58, %v63
  %v80 = vmul.f32 %v58, %v64
  %v81 = vmul.f32 %v58, %v65
  %v82 = vmul.f32 %v58, %v66
  %v83 = vmul.f32 %v58, %v67
  %v84 = vadd.f32 %v43, %v68
  %v85 = vadd.f32 %v43, %v69
  %v86 = vadd.f32 %v43, %v70
  %v87 = vadd.f32 %v43, %v71
  %v88 = vadd.f32 %v43, %v72
  %v89 = vadd.f32 %v43, %v73
  %v90 = vadd.f32 %v43, %v74
  %v91 = vadd.f32 %v43, %v75
  %v92 = vadd.f32 %v48, %v76
  %v93 = vadd.f32 %v48, %v77
  %v94 = vadd.f32 %v48, %v78
  %v95 = vadd.f32 %v48, %v79
  %v96 = vadd.f32 %v48, %v80
  %v97 = vadd.f32 %v48, %v81
  %v98 = vadd.f32 %v48, %v82
  %v99 = vadd.f32 %v48, %v83
  %100 = vset.pattern.permute.xlu0 1
  %101 = vperm.xlu0 %100, %v36
  %v102 = vpop.permute.xlu0 %101
  %104 = vset.pattern.permute.xlu0 1
  %105 = vperm.xlu0 %104, %v37
  %v106 = vpop.permute.xlu0 %105
  %v108 = vperm.slane %v28, 1
  %v109 = vperm.slane %v29, 1
  %v110 = vperm.slane %v30, 1
  %v111 = vperm.slane %v31, 1
  %v112 = vperm.slane %v32, 1
  %v113 = vperm.slane %v33, 1
  %v114 = vperm.slane %v34, 1
  %v115 = vperm.slane %v35, 1
  %v116 = vmul.f32 %v102, %v108
  %v117 = vmul.f32 %v102, %v109
  %v118 = vmul.f32 %v102, %v110
  %v119 = vmul.f32 %v102, %v111
  %v120 = vmul.f32 %v102, %v112
  %v121 = vmul.f32 %v102, %v113
  %v122 = vmul.f32 %v102, %v114
  %v123 = vmul.f32 %v102, %v115
  %v124 = vmul.f32 %v106, %v108
  %v125 = vmul.f32 %v106, %v109
  %v126 = vmul.f32 %v106, %v110
  %v127 = vmul.f32 %v106, %v111
  %v128 = vmul.f32 %v106, %v112
  %v129 = vmul.f32 %v106, %v113
  %v130 = vmul.f32 %v106, %v114
  %v131 = vmul.f32 %v106, %v115
  %v132 = vadd.f32 %v84, %v116
  %v133 = vadd.f32 %v85, %v117
  %v134 = vadd.f32 %v86, %v118
  %v135 = vadd.f32 %v87, %v119
  %v136 = vadd.f32 %v88, %v120
  %v137 = vadd.f32 %v89, %v121
  %v138 = vadd.f32 %v90, %v122
  %v139 = vadd.f32 %v91, %v123
  %v140 = vadd.f32 %v92, %v124
  %v141 = vadd.f32 %v93, %v125
  %v142 = vadd.f32 %v94, %v126
  %v143 = vadd.f32 %v95, %v127
  %v144 = vadd.f32 %v96, %v128
  %v145 = vadd.f32 %v97, %v129
  %v146 = vadd.f32 %v98, %v130
  %v147 = vadd.f32 %v99, %v131
  %148 = vset.pattern.permute.xlu0 2
  %149 = vperm.xlu0 %148, %v36
  %v150 = vpop.permute.xlu0 %149
  %152 = vset.pattern.permute.xlu0 2
  %153 = vperm.xlu0 %152, %v37
  %v154 = vpop.permute.xlu0 %153
  %v156 = vperm.slane %v28, 2
  %v157 = vperm.slane %v29, 2
  %v158 = vperm.slane %v30, 2
  %v159 = vperm.slane %v31, 2
  %v160 = vperm.slane %v32, 2
  %v161 = vperm.slane %v33, 2
  %v162 = vperm.slane %v34, 2
  %v163 = vperm.slane %v35, 2
  %v164 = vmul.f32 %v150, %v156
  %v165 = vmul.f32 %v150, %v157
  %v166 = vmul.f32 %v150, %v158
  %v167 = vmul.f32 %v150, %v159
  %v168 = vmul.f32 %v150, %v160
  %v169 = vmul.f32 %v150, %v161
  %v170 = vmul.f32 %v150, %v162
  %v171 = vmul.f32 %v150, %v163
  %v172 = vmul.f32 %v154, %v156
  %v173 = vmul.f32 %v154, %v157
  %v174 = vmul.f32 %v154, %v158
  %v175 = vmul.f32 %v154, %v159
  %v176 = vmul.f32 %v154, %v160
  %v177 = vmul.f32 %v154, %v161
  %v178 = vmul.f32 %v154, %v162
  %v179 = vmul.f32 %v154, %v163
  %v180 = vadd.f32 %v132, %v164
  %v181 = vadd.f32 %v133, %v165
  %v182 = vadd.f32 %v134, %v166
  %v183 = vadd.f32 %v135, %v167
  %v184 = vadd.f32 %v136, %v168
  %v185 = vadd.f32 %v137, %v169
  %v186 = vadd.f32 %v138, %v170
  %v187 = vadd.f32 %v139, %v171
  %v188 = vadd.f32 %v140, %v172
  %v189 = vadd.f32 %v141, %v173
  %v190 = vadd.f32 %v142, %v174
  %v191 = vadd.f32 %v143, %v175
  %v192 = vadd.f32 %v144, %v176
  %v193 = vadd.f32 %v145, %v177
  %v194 = vadd.f32 %v146, %v178
  %v195 = vadd.f32 %v147, %v179
  %196 = vset.pattern.permute.xlu0 3
  %197 = vperm.xlu0 %196, %v36
  %v198 = vpop.permute.xlu0 %197
  %200 = vset.pattern.permute.xlu0 3
  %201 = vperm.xlu0 %200, %v37
  %v202 = vpop.permute.xlu0 %201
  %v204 = vperm.slane %v28, 3
  %v205 = vperm.slane %v29, 3
  %v206 = vperm.slane %v30, 3
  %v207 = vperm.slane %v31, 3
  %v208 = vperm.slane %v32, 3
  %v209 = vperm.slane %v33, 3
  %v210 = vperm.slane %v34, 3
  %v211 = vperm.slane %v35, 3
  %v212 = vmul.f32 %v198, %v204
  %v213 = vmul.f32 %v198, %v205
  %v214 = vmul.f32 %v198, %v206
  %v215 = vmul.f32 %v198, %v207
  %v216 = vmul.f32 %v198, %v208
  %v217 = vmul.f32 %v198, %v209
  %v218 = vmul.f32 %v198, %v210
  %v219 = vmul.f32 %v198, %v211
  %v220 = vmul.f32 %v202, %v204
  %v221 = vmul.f32 %v202, %v205
  %v222 = vmul.f32 %v202, %v206
  %v223 = vmul.f32 %v202, %v207
  %v224 = vmul.f32 %v202, %v208
  %v225 = vmul.f32 %v202, %v209
  %v226 = vmul.f32 %v202, %v210
  %v227 = vmul.f32 %v202, %v211
  %v228 = vadd.f32 %v180, %v212
  %v229 = vadd.f32 %v181, %v213
  %v230 = vadd.f32 %v182, %v214
  %v231 = vadd.f32 %v183, %v215
  %v232 = vadd.f32 %v184, %v216
  %v233 = vadd.f32 %v185, %v217
  %v234 = vadd.f32 %v186, %v218
  %v235 = vadd.f32 %v187, %v219
  %v236 = vadd.f32 %v188, %v220
  %v237 = vadd.f32 %v189, %v221
  %v238 = vadd.f32 %v190, %v222
  %v239 = vadd.f32 %v191, %v223
  %v240 = vadd.f32 %v192, %v224
  %v241 = vadd.f32 %v193, %v225
  %v242 = vadd.f32 %v194, %v226
  %v243 = vadd.f32 %v195, %v227
  %244 = vset.pattern.permute.xlu0 4
  %245 = vperm.xlu0 %244, %v36
  %v246 = vpop.permute.xlu0 %245
  %248 = vset.pattern.permute.xlu0 4
  %249 = vperm.xlu0 %248, %v37
  %v250 = vpop.permute.xlu0 %249
  %v252 = vperm.slane %v28, 4
  %v253 = vperm.slane %v29, 4
  %v254 = vperm.slane %v30, 4
  %v255 = vperm.slane %v31, 4
  %v256 = vperm.slane %v32, 4
  %v257 = vperm.slane %v33, 4
  %v258 = vperm.slane %v34, 4
  %v259 = vperm.slane %v35, 4
  %v260 = vmul.f32 %v246, %v252
  %v261 = vmul.f32 %v246, %v253
  %v262 = vmul.f32 %v246, %v254
  %v263 = vmul.f32 %v246, %v255
  %v264 = vmul.f32 %v246, %v256
  %v265 = vmul.f32 %v246, %v257
  %v266 = vmul.f32 %v246, %v258
  %v267 = vmul.f32 %v246, %v259
  %v268 = vmul.f32 %v250, %v252
  %v269 = vmul.f32 %v250, %v253
  %v270 = vmul.f32 %v250, %v254
  %v271 = vmul.f32 %v250, %v255
  %v272 = vmul.f32 %v250, %v256
  %v273 = vmul.f32 %v250, %v257
  %v274 = vmul.f32 %v250, %v258
  %v275 = vmul.f32 %v250, %v259
  %v276 = vadd.f32 %v228, %v260
  %v277 = vadd.f32 %v229, %v261
  %v278 = vadd.f32 %v230, %v262
  %v279 = vadd.f32 %v231, %v263
  %v280 = vadd.f32 %v232, %v264
  %v281 = vadd.f32 %v233, %v265
  %v282 = vadd.f32 %v234, %v266
  %v283 = vadd.f32 %v235, %v267
  %v284 = vadd.f32 %v236, %v268
  %v285 = vadd.f32 %v237, %v269
  %v286 = vadd.f32 %v238, %v270
  %v287 = vadd.f32 %v239, %v271
  %v288 = vadd.f32 %v240, %v272
  %v289 = vadd.f32 %v241, %v273
  %v290 = vadd.f32 %v242, %v274
  %v291 = vadd.f32 %v243, %v275
  %292 = vset.pattern.permute.xlu0 5
  %293 = vperm.xlu0 %292, %v36
  %v294 = vpop.permute.xlu0 %293
  %296 = vset.pattern.permute.xlu0 5
  %297 = vperm.xlu0 %296, %v37
  %v298 = vpop.permute.xlu0 %297
  %v300 = vperm.slane %v28, 5
  %v301 = vperm.slane %v29, 5
  %v302 = vperm.slane %v30, 5
  %v303 = vperm.slane %v31, 5
  %v304 = vperm.slane %v32, 5
  %v305 = vperm.slane %v33, 5
  %v306 = vperm.slane %v34, 5
  %v307 = vperm.slane %v35, 5
  %v308 = vmul.f32 %v294, %v300
  %v309 = vmul.f32 %v294, %v301
  %v310 = vmul.f32 %v294, %v302
  %v311 = vmul.f32 %v294, %v303
  %v312 = vmul.f32 %v294, %v304
  %v313 = vmul.f32 %v294, %v305
  %v314 = vmul.f32 %v294, %v306
  %v315 = vmul.f32 %v294, %v307
  %v316 = vmul.f32 %v298, %v300
  %v317 = vmul.f32 %v298, %v301
  %v318 = vmul.f32 %v298, %v302
  %v319 = vmul.f32 %v298, %v303
  %v320 = vmul.f32 %v298, %v304
  %v321 = vmul.f32 %v298, %v305
  %v322 = vmul.f32 %v298, %v306
  %v323 = vmul.f32 %v298, %v307
  %v324 = vadd.f32 %v276, %v308
  %v325 = vadd.f32 %v277, %v309
  %v326 = vadd.f32 %v278, %v310
  %v327 = vadd.f32 %v279, %v311
  %v328 = vadd.f32 %v280, %v312
  %v329 = vadd.f32 %v281, %v313
  %v330 = vadd.f32 %v282, %v314
  %v331 = vadd.f32 %v283, %v315
  %v332 = vadd.f32 %v284, %v316
  %v333 = vadd.f32 %v285, %v317
  %v334 = vadd.f32 %v286, %v318
  %v335 = vadd.f32 %v287, %v319
  %v336 = vadd.f32 %v288, %v320
  %v337 = vadd.f32 %v289, %v321
  %v338 = vadd.f32 %v290, %v322
  %v339 = vadd.f32 %v291, %v323
  %340 = vset.pattern.permute.xlu0 6
  %341 = vperm.xlu0 %340, %v36
  %v342 = vpop.permute.xlu0 %341
  %344 = vset.pattern.permute.xlu0 6
  %345 = vperm.xlu0 %344, %v37
  %v346 = vpop.permute.xlu0 %345
  %v348 = vperm.slane %v28, 6
  %v349 = vperm.slane %v29, 6
  %v350 = vperm.slane %v30, 6
  %v351 = vperm.slane %v31, 6
  %v352 = vperm.slane %v32, 6
  %v353 = vperm.slane %v33, 6
  %v354 = vperm.slane %v34, 6
  %v355 = vperm.slane %v35, 6
  %v356 = vmul.f32 %v342, %v348
  %v357 = vmul.f32 %v342, %v349
  %v358 = vmul.f32 %v342, %v350
  %v359 = vmul.f32 %v342, %v351
  %v360 = vmul.f32 %v342, %v352
  %v361 = vmul.f32 %v342, %v353
  %v362 = vmul.f32 %v342, %v354
  %v363 = vmul.f32 %v342, %v355
  %v364 = vmul.f32 %v346, %v348
  %v365 = vmul.f32 %v346, %v349
  %v366 = vmul.f32 %v346, %v350
  %v367 = vmul.f32 %v346, %v351
  %v368 = vmul.f32 %v346, %v352
  %v369 = vmul.f32 %v346, %v353
  %v370 = vmul.f32 %v346, %v354
  %v371 = vmul.f32 %v346, %v355
  %v372 = vadd.f32 %v324, %v356
  %v373 = vadd.f32 %v325, %v357
  %v374 = vadd.f32 %v326, %v358
  %v375 = vadd.f32 %v327, %v359
  %v376 = vadd.f32 %v328, %v360
  %v377 = vadd.f32 %v329, %v361
  %v378 = vadd.f32 %v330, %v362
  %v379 = vadd.f32 %v331, %v363
  %v380 = vadd.f32 %v332, %v364
  %v381 = vadd.f32 %v333, %v365
  %v382 = vadd.f32 %v334, %v366
  %v383 = vadd.f32 %v335, %v367
  %v384 = vadd.f32 %v336, %v368
  %v385 = vadd.f32 %v337, %v369
  %v386 = vadd.f32 %v338, %v370
  %v387 = vadd.f32 %v339, %v371
  %388 = vset.pattern.permute.xlu0 7
  %389 = vperm.xlu0 %388, %v36
  %v390 = vpop.permute.xlu0 %389
  %392 = vset.pattern.permute.xlu0 7
  %393 = vperm.xlu0 %392, %v37
  %v394 = vpop.permute.xlu0 %393
  %v396 = vperm.slane %v28, 7
  %v397 = vperm.slane %v29, 7
  %v398 = vperm.slane %v30, 7
  %v399 = vperm.slane %v31, 7
  %v400 = vperm.slane %v32, 7
  %v401 = vperm.slane %v33, 7
  %v402 = vperm.slane %v34, 7
  %v403 = vperm.slane %v35, 7
  %v404 = vmul.f32 %v390, %v396
  %v405 = vmul.f32 %v390, %v397
  %v406 = vmul.f32 %v390, %v398
  %v407 = vmul.f32 %v390, %v399
  %v408 = vmul.f32 %v390, %v400
  %v409 = vmul.f32 %v390, %v401
  %v410 = vmul.f32 %v390, %v402
  %v411 = vmul.f32 %v390, %v403
  %v412 = vmul.f32 %v394, %v396
  %v413 = vmul.f32 %v394, %v397
  %v414 = vmul.f32 %v394, %v398
  %v415 = vmul.f32 %v394, %v399
  %v416 = vmul.f32 %v394, %v400
  %v417 = vmul.f32 %v394, %v401
  %v418 = vmul.f32 %v394, %v402
  %v419 = vmul.f32 %v394, %v403
  %v420 = vadd.f32 %v372, %v404
  %v421 = vadd.f32 %v373, %v405
  %v422 = vadd.f32 %v374, %v406
  %v423 = vadd.f32 %v375, %v407
  %v424 = vadd.f32 %v376, %v408
  %v425 = vadd.f32 %v377, %v409
  %v426 = vadd.f32 %v378, %v410
  %v427 = vadd.f32 %v379, %v411
  %v428 = vadd.f32 %v380, %v412
  %v429 = vadd.f32 %v381, %v413
  %v430 = vadd.f32 %v382, %v414
  %v431 = vadd.f32 %v383, %v415
  %v432 = vadd.f32 %v384, %v416
  %v433 = vadd.f32 %v385, %v417
  %v434 = vadd.f32 %v386, %v418
  %v435 = vadd.f32 %v387, %v419
  %v436 = vxor.u32 %v420, 2147483648
  %v437 = vxor.u32 %v421, 2147483648
  %v438 = vxor.u32 %v422, 2147483648
  %v439 = vxor.u32 %v423, 2147483648
  %v440 = vxor.u32 %v424, 2147483648
  %v441 = vxor.u32 %v425, 2147483648
  %v442 = vxor.u32 %v426, 2147483648
  %v443 = vxor.u32 %v427, 2147483648
  %v444 = vxor.u32 %v428, 2147483648
  %v445 = vxor.u32 %v429, 2147483648
  %v446 = vxor.u32 %v430, 2147483648
  %v447 = vxor.u32 %v431, 2147483648
  %v448 = vxor.u32 %v432, 2147483648
  %v449 = vxor.u32 %v433, 2147483648
  %v450 = vxor.u32 %v434, 2147483648
  %v451 = vxor.u32 %v435, 2147483648
  %v452 = vmul.f32 %v436, 1.442695
  %v453 = vpow.pop %v452
  %v454 = vmul.f32 %v437, 1.442695
  %v455 = vpow.pop %v454
  %v456 = vmul.f32 %v438, 1.442695
  %v457 = vpow.pop %v456
  %v458 = vmul.f32 %v439, 1.442695
  %v459 = vpow.pop %v458
  %v460 = vmul.f32 %v440, 1.442695
  %v461 = vpow.pop %v460
  %v462 = vmul.f32 %v441, 1.442695
  %v463 = vpow.pop %v462
  %v464 = vmul.f32 %v442, 1.442695
  %v465 = vpow.pop %v464
  %v466 = vmul.f32 %v443, 1.442695
  %v467 = vpow.pop %v466
  %v468 = vmul.f32 %v444, 1.442695
  %v469 = vpow.pop %v468
  %v470 = vmul.f32 %v445, 1.442695
  %v471 = vpow.pop %v470
  %v472 = vmul.f32 %v446, 1.442695
  %v473 = vpow.pop %v472
  %v474 = vmul.f32 %v447, 1.442695
  %v475 = vpow.pop %v474
  %v476 = vmul.f32 %v448, 1.442695
  %v477 = vpow.pop %v476
  %v478 = vmul.f32 %v449, 1.442695
  %v479 = vpow.pop %v478
  %v480 = vmul.f32 %v450, 1.442695
  %v481 = vpow.pop %v480
  %v482 = vmul.f32 %v451, 1.442695
  %v483 = vpow.pop %v482
  %v484 = vadd.f32 %v453, 1.0
  %v485 = vadd.f32 %v455, 1.0
  %v486 = vadd.f32 %v457, 1.0
  %v487 = vadd.f32 %v459, 1.0
  %v488 = vadd.f32 %v461, 1.0
  %v489 = vadd.f32 %v463, 1.0
  %v490 = vadd.f32 %v465, 1.0
  %v491 = vadd.f32 %v467, 1.0
  %v492 = vadd.f32 %v469, 1.0
  %v493 = vadd.f32 %v471, 1.0
  %v494 = vadd.f32 %v473, 1.0
  %v495 = vadd.f32 %v475, 1.0
  %v496 = vadd.f32 %v477, 1.0
  %v497 = vadd.f32 %v479, 1.0
  %v498 = vadd.f32 %v481, 1.0
  %v499 = vadd.f32 %v483, 1.0
  %v500 = vrcp.pop %v484
  %v501 = vmul.f32 %v484, %v500
  %v502 = vsub.f32 1.0, %v501
  %v503 = vmul.f32 %v500, %v502
  %v504 = vadd.f32 %v500, %v503
  %vm505 = vweird.f32 %v484
  %vm506 = vweird.f32 %v500
  %vm507 = vmor %vm505, %vm506
  %v508 = vsel %vm507, %v500, %v504
  %v509 = vand.u32 2147483647, %v484
  %vm510 = vcmp.eq.f32.partialorder %v509, 8.507059e+37
  %v511 = vand.u32 %v484, 2147483648
  %v512 = vor.u32 1.1754944e-38, %v511
  %v513 = vsel %vm510, %v512, %v508
  %v514 = vmul.f32 1.0, %v513
  %v515 = vrcp.pop %v485
  %v516 = vmul.f32 %v485, %v515
  %v517 = vsub.f32 1.0, %v516
  %v518 = vmul.f32 %v515, %v517
  %v519 = vadd.f32 %v515, %v518
  %vm520 = vweird.f32 %v485
  %vm521 = vweird.f32 %v515
  %vm522 = vmor %vm520, %vm521
  %v523 = vsel %vm522, %v515, %v519
  %v524 = vand.u32 2147483647, %v485
  %vm525 = vcmp.eq.f32.partialorder %v524, 8.507059e+37
  %v526 = vand.u32 %v485, 2147483648
  %v527 = vor.u32 1.1754944e-38, %v526
  %v528 = vsel %vm525, %v527, %v523
  %v529 = vmul.f32 1.0, %v528
  %v530 = vrcp.pop %v486
  %v531 = vmul.f32 %v486, %v530
  %v532 = vsub.f32 1.0, %v531
  %v533 = vmul.f32 %v530, %v532
  %v534 = vadd.f32 %v530, %v533
  %vm535 = vweird.f32 %v486
  %vm536 = vweird.f32 %v530
  %vm537 = vmor %vm535, %vm536
  %v538 = vsel %vm537, %v530, %v534
  %v539 = vand.u32 2147483647, %v486
  %vm540 = vcmp.eq.f32.partialorder %v539, 8.507059e+37
  %v541 = vand.u32 %v486, 2147483648
  %v542 = vor.u32 1.1754944e-38, %v541
  %v543 = vsel %vm540, %v542, %v538
  %v544 = vmul.f32 1.0, %v543
  %v545 = vrcp.pop %v487
  %v546 = vmul.f32 %v487, %v545
  %v547 = vsub.f32 1.0, %v546
  %v548 = vmul.f32 %v545, %v547
  %v549 = vadd.f32 %v545, %v548
  %vm550 = vweird.f32 %v487
  %vm551 = vweird.f32 %v545
  %vm552 = vmor %vm550, %vm551
  %v553 = vsel %vm552, %v545, %v549
  %v554 = vand.u32 2147483647, %v487
  %vm555 = vcmp.eq.f32.partialorder %v554, 8.507059e+37
  %v556 = vand.u32 %v487, 2147483648
  %v557 = vor.u32 1.1754944e-38, %v556
  %v558 = vsel %vm555, %v557, %v553
  %v559 = vmul.f32 1.0, %v558
  %v560 = vrcp.pop %v488
  %v561 = vmul.f32 %v488, %v560
  %v562 = vsub.f32 1.0, %v561
  %v563 = vmul.f32 %v560, %v562
  %v564 = vadd.f32 %v560, %v563
  %vm565 = vweird.f32 %v488
  %vm566 = vweird.f32 %v560
  %vm567 = vmor %vm565, %vm566
  %v568 = vsel %vm567, %v560, %v564
  %v569 = vand.u32 2147483647, %v488
  %vm570 = vcmp.eq.f32.partialorder %v569, 8.507059e+37
  %v571 = vand.u32 %v488, 2147483648
  %v572 = vor.u32 1.1754944e-38, %v571
  %v573 = vsel %vm570, %v572, %v568
  %v574 = vmul.f32 1.0, %v573
  %v575 = vrcp.pop %v489
  %v576 = vmul.f32 %v489, %v575
  %v577 = vsub.f32 1.0, %v576
  %v578 = vmul.f32 %v575, %v577
  %v579 = vadd.f32 %v575, %v578
  %vm580 = vweird.f32 %v489
  %vm581 = vweird.f32 %v575
  %vm582 = vmor %vm580, %vm581
  %v583 = vsel %vm582, %v575, %v579
  %v584 = vand.u32 2147483647, %v489
  %vm585 = vcmp.eq.f32.partialorder %v584, 8.507059e+37
  %v586 = vand.u32 %v489, 2147483648
  %v587 = vor.u32 1.1754944e-38, %v586
  %v588 = vsel %vm585, %v587, %v583
  %v589 = vmul.f32 1.0, %v588
  %v590 = vrcp.pop %v490
  %v591 = vmul.f32 %v490, %v590
  %v592 = vsub.f32 1.0, %v591
  %v593 = vmul.f32 %v590, %v592
  %v594 = vadd.f32 %v590, %v593
  %vm595 = vweird.f32 %v490
  %vm596 = vweird.f32 %v590
  %vm597 = vmor %vm595, %vm596
  %v598 = vsel %vm597, %v590, %v594
  %v599 = vand.u32 2147483647, %v490
  %vm600 = vcmp.eq.f32.partialorder %v599, 8.507059e+37
  %v601 = vand.u32 %v490, 2147483648
  %v602 = vor.u32 1.1754944e-38, %v601
  %v603 = vsel %vm600, %v602, %v598
  %v604 = vmul.f32 1.0, %v603
  %v605 = vrcp.pop %v491
  %v606 = vmul.f32 %v491, %v605
  %v607 = vsub.f32 1.0, %v606
  %v608 = vmul.f32 %v605, %v607
  %v609 = vadd.f32 %v605, %v608
  %vm610 = vweird.f32 %v491
  %vm611 = vweird.f32 %v605
  %vm612 = vmor %vm610, %vm611
  %v613 = vsel %vm612, %v605, %v609
  %v614 = vand.u32 2147483647, %v491
  %vm615 = vcmp.eq.f32.partialorder %v614, 8.507059e+37
  %v616 = vand.u32 %v491, 2147483648
  %v617 = vor.u32 1.1754944e-38, %v616
  %v618 = vsel %vm615, %v617, %v613
  %v619 = vmul.f32 1.0, %v618
  %v620 = vrcp.pop %v492
  %v621 = vmul.f32 %v492, %v620
  %v622 = vsub.f32 1.0, %v621
  %v623 = vmul.f32 %v620, %v622
  %v624 = vadd.f32 %v620, %v623
  %vm625 = vweird.f32 %v492
  %vm626 = vweird.f32 %v620
  %vm627 = vmor %vm625, %vm626
  %v628 = vsel %vm627, %v620, %v624
  %v629 = vand.u32 2147483647, %v492
  %vm630 = vcmp.eq.f32.partialorder %v629, 8.507059e+37
  %v631 = vand.u32 %v492, 2147483648
  %v632 = vor.u32 1.1754944e-38, %v631
  %v633 = vsel %vm630, %v632, %v628
  %v634 = vmul.f32 1.0, %v633
  %v635 = vrcp.pop %v493
  %v636 = vmul.f32 %v493, %v635
  %v637 = vsub.f32 1.0, %v636
  %v638 = vmul.f32 %v635, %v637
  %v639 = vadd.f32 %v635, %v638
  %vm640 = vweird.f32 %v493
  %vm641 = vweird.f32 %v635
  %vm642 = vmor %vm640, %vm641
  %v643 = vsel %vm642, %v635, %v639
  %v644 = vand.u32 2147483647, %v493
  %vm645 = vcmp.eq.f32.partialorder %v644, 8.507059e+37
  %v646 = vand.u32 %v493, 2147483648
  %v647 = vor.u32 1.1754944e-38, %v646
  %v648 = vsel %vm645, %v647, %v643
  %v649 = vmul.f32 1.0, %v648
  %v650 = vrcp.pop %v494
  %v651 = vmul.f32 %v494, %v650
  %v652 = vsub.f32 1.0, %v651
  %v653 = vmul.f32 %v650, %v652
  %v654 = vadd.f32 %v650, %v653
  %vm655 = vweird.f32 %v494
  %vm656 = vweird.f32 %v650
  %vm657 = vmor %vm655, %vm656
  %v658 = vsel %vm657, %v650, %v654
  %v659 = vand.u32 2147483647, %v494
  %vm660 = vcmp.eq.f32.partialorder %v659, 8.507059e+37
  %v661 = vand.u32 %v494, 2147483648
  %v662 = vor.u32 1.1754944e-38, %v661
  %v663 = vsel %vm660, %v662, %v658
  %v664 = vmul.f32 1.0, %v663
  %v665 = vrcp.pop %v495
  %v666 = vmul.f32 %v495, %v665
  %v667 = vsub.f32 1.0, %v666
  %v668 = vmul.f32 %v665, %v667
  %v669 = vadd.f32 %v665, %v668
  %vm670 = vweird.f32 %v495
  %vm671 = vweird.f32 %v665
  %vm672 = vmor %vm670, %vm671
  %v673 = vsel %vm672, %v665, %v669
  %v674 = vand.u32 2147483647, %v495
  %vm675 = vcmp.eq.f32.partialorder %v674, 8.507059e+37
  %v676 = vand.u32 %v495, 2147483648
  %v677 = vor.u32 1.1754944e-38, %v676
  %v678 = vsel %vm675, %v677, %v673
  %v679 = vmul.f32 1.0, %v678
  %v680 = vrcp.pop %v496
  %v681 = vmul.f32 %v496, %v680
  %v682 = vsub.f32 1.0, %v681
  %v683 = vmul.f32 %v680, %v682
  %v684 = vadd.f32 %v680, %v683
  %vm685 = vweird.f32 %v496
  %vm686 = vweird.f32 %v680
  %vm687 = vmor %vm685, %vm686
  %v688 = vsel %vm687, %v680, %v684
  %v689 = vand.u32 2147483647, %v496
  %vm690 = vcmp.eq.f32.partialorder %v689, 8.507059e+37
  %v691 = vand.u32 %v496, 2147483648
  %v692 = vor.u32 1.1754944e-38, %v691
  %v693 = vsel %vm690, %v692, %v688
  %v694 = vmul.f32 1.0, %v693
  %v695 = vrcp.pop %v497
  %v696 = vmul.f32 %v497, %v695
  %v697 = vsub.f32 1.0, %v696
  %v698 = vmul.f32 %v695, %v697
  %v699 = vadd.f32 %v695, %v698
  %vm700 = vweird.f32 %v497
  %vm701 = vweird.f32 %v695
  %vm702 = vmor %vm700, %vm701
  %v703 = vsel %vm702, %v695, %v699
  %v704 = vand.u32 2147483647, %v497
  %vm705 = vcmp.eq.f32.partialorder %v704, 8.507059e+37
  %v706 = vand.u32 %v497, 2147483648
  %v707 = vor.u32 1.1754944e-38, %v706
  %v708 = vsel %vm705, %v707, %v703
  %v709 = vmul.f32 1.0, %v708
  %v710 = vrcp.pop %v498
  %v711 = vmul.f32 %v498, %v710
  %v712 = vsub.f32 1.0, %v711
  %v713 = vmul.f32 %v710, %v712
  %v714 = vadd.f32 %v710, %v713
  %vm715 = vweird.f32 %v498
  %vm716 = vweird.f32 %v710
  %vm717 = vmor %vm715, %vm716
  %v718 = vsel %vm717, %v710, %v714
  %v719 = vand.u32 2147483647, %v498
  %vm720 = vcmp.eq.f32.partialorder %v719, 8.507059e+37
  %v721 = vand.u32 %v498, 2147483648
  %v722 = vor.u32 1.1754944e-38, %v721
  %v723 = vsel %vm720, %v722, %v718
  %v724 = vmul.f32 1.0, %v723
  %v725 = vrcp.pop %v499
  %v726 = vmul.f32 %v499, %v725
  %v727 = vsub.f32 1.0, %v726
  %v728 = vmul.f32 %v725, %v727
  %v729 = vadd.f32 %v725, %v728
  %vm730 = vweird.f32 %v499
  %vm731 = vweird.f32 %v725
  %vm732 = vmor %vm730, %vm731
  %v733 = vsel %vm732, %v725, %v729
  %v734 = vand.u32 2147483647, %v499
  %vm735 = vcmp.eq.f32.partialorder %v734, 8.507059e+37
  %v736 = vand.u32 %v499, 2147483648
  %v737 = vor.u32 1.1754944e-38, %v736
  %v738 = vsel %vm735, %v737, %v733
  %v739 = vmul.f32 1.0, %v738
  %v740 = vmul.f32 %v420, %v514
  %v741 = vmul.f32 %v421, %v529
  %v742 = vmul.f32 %v422, %v544
  %v743 = vmul.f32 %v423, %v559
  %v744 = vmul.f32 %v424, %v574
  %v745 = vmul.f32 %v425, %v589
  %v746 = vmul.f32 %v426, %v604
  %v747 = vmul.f32 %v427, %v619
  %v748 = vmul.f32 %v428, %v634
  %v749 = vmul.f32 %v429, %v649
  %v750 = vmul.f32 %v430, %v664
  %v751 = vmul.f32 %v431, %v679
  %v752 = vmul.f32 %v432, %v694
  %v753 = vmul.f32 %v433, %v709
  %v754 = vmul.f32 %v434, %v724
  %v755 = vmul.f32 %v435, %v739
  %v756 = vsel %vm20, 1, 0
  %v757 = vsel %vm21, 1, 0
  %v758 = vsel %vm22, 1, 0
  %v759 = vsel %vm23, 1, 0
  %v760 = vsel %vm24, 1, 0
  %v761 = vsel %vm25, 1, 0
  %v762 = vsel %vm26, 1, 0
  %v763 = vsel %vm27, 1, 0
  %vm764 = vcmp.eq.s32.totalorder %v756, 1
  %vm765 = vcmp.eq.s32.totalorder %v757, 1
  %vm766 = vcmp.eq.s32.totalorder %v758, 1
  %vm767 = vcmp.eq.s32.totalorder %v759, 1
  %vm768 = vcmp.eq.s32.totalorder %v760, 1
  %vm769 = vcmp.eq.s32.totalorder %v761, 1
  %vm770 = vcmp.eq.s32.totalorder %v762, 1
  %vm771 = vcmp.eq.s32.totalorder %v763, 1
  %v772 = vsel %vm764, %v740, 0.0
  %v773 = vsel %vm765, %v741, 0.0
  %v774 = vsel %vm766, %v742, 0.0
  %v775 = vsel %vm767, %v743, 0.0
  %v776 = vsel %vm768, %v744, 0.0
  %v777 = vsel %vm769, %v745, 0.0
  %v778 = vsel %vm770, %v746, 0.0
  %v779 = vsel %vm771, %v747, 0.0
  %v780 = vsel %vm764, %v748, 0.0
  %v781 = vsel %vm765, %v749, 0.0
  %v782 = vsel %vm766, %v750, 0.0
  %v783 = vsel %vm767, %v751, 0.0
  %v784 = vsel %vm768, %v752, 0.0
  %v785 = vsel %vm769, %v753, 0.0
  %v786 = vsel %vm770, %v754, 0.0
  %v787 = vsel %vm771, %v755, 0.0
  %v788 = vadd.f32 %v772, %v773
  %v789 = vadd.f32 %v788, %v774
  %v790 = vadd.f32 %v789, %v775
  %v791 = vadd.f32 %v790, %v776
  %v792 = vadd.f32 %v791, %v777
  %v793 = vadd.f32 %v792, %v778
  %v794 = vadd.f32 %v793, %v779
  %795 = vadd.xlane.f32.xlu0 %v794
  %v796 = vpop.xlane.xlu0 %795
  %v797 = vadd.f32 %v780, %v781
  %v798 = vadd.f32 %v797, %v782
  %v799 = vadd.f32 %v798, %v783
  %v800 = vadd.f32 %v799, %v784
  %v801 = vadd.f32 %v800, %v785
  %v802 = vadd.f32 %v801, %v786
  %v803 = vadd.f32 %v802, %v787
  %804 = vadd.xlane.f32.xlu0 %v803
  %v805 = vpop.xlane.xlu0 %804
  %v806 = vmul.f32 %v796, 0.001
  %v807 = vmul.f32 %v805, 0.001
  %v808 = vsub.f32 %v740, %v806
  %v809 = vsub.f32 %v741, %v806
  %v810 = vsub.f32 %v742, %v806
  %v811 = vsub.f32 %v743, %v806
  %v812 = vsub.f32 %v744, %v806
  %v813 = vsub.f32 %v745, %v806
  %v814 = vsub.f32 %v746, %v806
  %v815 = vsub.f32 %v747, %v806
  %v816 = vsub.f32 %v748, %v807
  %v817 = vsub.f32 %v749, %v807
  %v818 = vsub.f32 %v750, %v807
  %v819 = vsub.f32 %v751, %v807
  %v820 = vsub.f32 %v752, %v807
  %v821 = vsub.f32 %v753, %v807
  %v822 = vsub.f32 %v754, %v807
  %v823 = vsub.f32 %v755, %v807
  %v824 = vsel %vm764, %v808, 0.0
  %v825 = vsel %vm765, %v809, 0.0
  %v826 = vsel %vm766, %v810, 0.0
  %v827 = vsel %vm767, %v811, 0.0
  %v828 = vsel %vm768, %v812, 0.0
  %v829 = vsel %vm769, %v813, 0.0
  %v830 = vsel %vm770, %v814, 0.0
  %v831 = vsel %vm771, %v815, 0.0
  %v832 = vsel %vm764, %v816, 0.0
  %v833 = vsel %vm765, %v817, 0.0
  %v834 = vsel %vm766, %v818, 0.0
  %v835 = vsel %vm767, %v819, 0.0
  %v836 = vsel %vm768, %v820, 0.0
  %v837 = vsel %vm769, %v821, 0.0
  %v838 = vsel %vm770, %v822, 0.0
  %v839 = vsel %vm771, %v823, 0.0
  %v840 = vmul.f32 %v824, %v824
  %v841 = vmul.f32 %v825, %v825
  %v842 = vmul.f32 %v826, %v826
  %v843 = vmul.f32 %v827, %v827
  %v844 = vmul.f32 %v828, %v828
  %v845 = vmul.f32 %v829, %v829
  %v846 = vmul.f32 %v830, %v830
  %v847 = vmul.f32 %v831, %v831
  %v848 = vmul.f32 %v832, %v832
  %v849 = vmul.f32 %v833, %v833
  %v850 = vmul.f32 %v834, %v834
  %v851 = vmul.f32 %v835, %v835
  %v852 = vmul.f32 %v836, %v836
  %v853 = vmul.f32 %v837, %v837
  %v854 = vmul.f32 %v838, %v838
  %v855 = vmul.f32 %v839, %v839
  %v856 = vadd.f32 %v840, %v841
  %v857 = vadd.f32 %v856, %v842
  %v858 = vadd.f32 %v857, %v843
  %v859 = vadd.f32 %v858, %v844
  %v860 = vadd.f32 %v859, %v845
  %v861 = vadd.f32 %v860, %v846
  %v862 = vadd.f32 %v861, %v847
  %863 = vadd.xlane.f32.xlu0 %v862
  %v864 = vpop.xlane.xlu0 %863
  %v865 = vadd.f32 %v848, %v849
  %v866 = vadd.f32 %v865, %v850
  %v867 = vadd.f32 %v866, %v851
  %v868 = vadd.f32 %v867, %v852
  %v869 = vadd.f32 %v868, %v853
  %v870 = vadd.f32 %v869, %v854
  %v871 = vadd.f32 %v870, %v855
  %872 = vadd.xlane.f32.xlu0 %v871
  %v873 = vpop.xlane.xlu0 %872
  %v874 = vmul.f32 %v864, 0.001
  %v875 = vmul.f32 %v873, 0.001
  %v876 = vadd.f32 %v874, 1e-05
  %v877 = vadd.f32 %v875, 1e-05
  %v878 = vrsqrt.pop %v876
  %v879 = vmul.f32 %v878, %v876
  %v880 = vmul.f32 %v879, %v878
  %v881 = vmul.f32 0.5, %v880
  %v882 = vsub.f32 1.5, %v881
  %v883 = vmul.f32 %v878, %v882
  %vm884 = vweird.f32 %v876
  %vm885 = vweird.f32 %v878
  %vm886 = vmor %vm884, %vm885
  %v887 = vsel %vm886, %v878, %v883
  %v888 = vrsqrt.pop %v877
  %v889 = vmul.f32 %v888, %v877
  %v890 = vmul.f32 %v889, %v888
  %v891 = vmul.f32 0.5, %v890
  %v892 = vsub.f32 1.5, %v891
  %v893 = vmul.f32 %v888, %v892
  %vm894 = vweird.f32 %v877
  %vm895 = vweird.f32 %v888
  %vm896 = vmor %vm894, %vm895
  %v897 = vsel %vm896, %v888, %v893
  %v898 = vmul.f32 %v38, %v887
  %v899 = vmul.f32 %v39, %v897
  %901 = vset.pattern.permute.xlu0 1
  %902 = vperm.xlu0 %901, %v898
  %v903 = vpop.permute.xlu0 %902
  %906 = vset.pattern.permute.xlu0 1
  %907 = vperm.xlu0 %906, %v899
  %v908 = vpop.permute.xlu0 %907
  %v910 = vmul.f32 %v903, %v808
  %v911 = vmul.f32 %v903, %v809
  %v912 = vmul.f32 %v903, %v810
  %v913 = vmul.f32 %v903, %v811
  %v914 = vmul.f32 %v903, %v812
  %v915 = vmul.f32 %v903, %v813
  %v916 = vmul.f32 %v903, %v814
  %v917 = vmul.f32 %v903, %v815
  %v918 = vmul.f32 %v908, %v816
  %v919 = vmul.f32 %v908, %v817
  %v920 = vmul.f32 %v908, %v818
  %v921 = vmul.f32 %v908, %v819
  %v922 = vmul.f32 %v908, %v820
  %v923 = vmul.f32 %v908, %v821
  %v924 = vmul.f32 %v908, %v822
  %v925 = vmul.f32 %v908, %v823
  %926 = vset.pattern.permute.xlu0 2
  %927 = vperm.xlu0 %926, %v38
  %v928 = vpop.permute.xlu0 %927
  %930 = vset.pattern.permute.xlu0 2
  %931 = vperm.xlu0 %930, %v39
  %v932 = vpop.permute.xlu0 %931
  %v934 = vadd.f32 %v910, %v928
  %v935 = vadd.f32 %v911, %v928
  %v936 = vadd.f32 %v912, %v928
  %v937 = vadd.f32 %v913, %v928
  %v938 = vadd.f32 %v914, %v928
  %v939 = vadd.f32 %v915, %v928
  %v940 = vadd.f32 %v916, %v928
  %v941 = vadd.f32 %v917, %v928
  %v942 = vadd.f32 %v918, %v932
  %v943 = vadd.f32 %v919, %v932
  %v944 = vadd.f32 %v920, %v932
  %v945 = vadd.f32 %v921, %v932
  %v946 = vadd.f32 %v922, %v932
  %v947 = vadd.f32 %v923, %v932
  %v948 = vadd.f32 %v924, %v932
  %v949 = vadd.f32 %v925, %v932
  %v950 = vld [vmem:[%s0 + $0x20] sm:$0xff]
  %v951 = vld [vmem:[%s0 + $0x28] sm:$0xff]
  %953 = vset.pattern.permute.xlu0 0
  %954 = vperm.xlu0 %953, %v951
  %v955 = vpop.permute.xlu0 %954
  %958 = vset.pattern.permute.xlu0 0
  %959 = vperm.xlu0 %958, %v950
  %v960 = vpop.permute.xlu0 %959
  %v962 = vperm.slane %v934, 0
  %v963 = vperm.slane %v935, 0
  %v964 = vperm.slane %v936, 0
  %v965 = vperm.slane %v937, 0
  %v966 = vperm.slane %v938, 0
  %v967 = vperm.slane %v939, 0
  %v968 = vperm.slane %v940, 0
  %v969 = vperm.slane %v941, 0
  %v970 = vmul.f32 %v960, %v962
  %v971 = vmul.f32 %v960, %v963
  %v972 = vmul.f32 %v960, %v964
  %v973 = vmul.f32 %v960, %v965
  %v974 = vmul.f32 %v960, %v966
  %v975 = vmul.f32 %v960, %v967
  %v976 = vmul.f32 %v960, %v968
  %v977 = vmul.f32 %v960, %v969
  %v978 = vadd.f32 %v955, %v970
  %v979 = vadd.f32 %v955, %v971
  %v980 = vadd.f32 %v955, %v972
  %v981 = vadd.f32 %v955, %v973
  %v982 = vadd.f32 %v955, %v974
  %v983 = vadd.f32 %v955, %v975
  %v984 = vadd.f32 %v955, %v976
  %v985 = vadd.f32 %v955, %v977
  %986 = vset.pattern.permute.xlu0 1
  %987 = vperm.xlu0 %986, %v950
  %v988 = vpop.permute.xlu0 %987
  %v990 = vperm.slane %v934, 1
  %v991 = vperm.slane %v935, 1
  %v992 = vperm.slane %v936, 1
  %v993 = vperm.slane %v937, 1
  %v994 = vperm.slane %v938, 1
  %v995 = vperm.slane %v939, 1
  %v996 = vperm.slane %v940, 1
  %v997 = vperm.slane %v941, 1
  %v998 = vmul.f32 %v988, %v990
  %v999 = vmul.f32 %v988, %v991
  %v1000 = vmul.f32 %v988, %v992
  %v1001 = vmul.f32 %v988, %v993
  %v1002 = vmul.f32 %v988, %v994
  %v1003 = vmul.f32 %v988, %v995
  %v1004 = vmul.f32 %v988, %v996
  %v1005 = vmul.f32 %v988, %v997
  %v1006 = vadd.f32 %v978, %v998
  %v1007 = vadd.f32 %v979, %v999
  %v1008 = vadd.f32 %v980, %v1000
  %v1009 = vadd.f32 %v981, %v1001
  %v1010 = vadd.f32 %v982, %v1002
  %v1011 = vadd.f32 %v983, %v1003
  %v1012 = vadd.f32 %v984, %v1004
  %v1013 = vadd.f32 %v985, %v1005
  %1014 = vset.pattern.permute.xlu0 2
  %1015 = vperm.xlu0 %1014, %v950
  %v1016 = vpop.permute.xlu0 %1015
  %v1018 = vperm.slane %v934, 2
  %v1019 = vperm.slane %v935, 2
  %v1020 = vperm.slane %v936, 2
  %v1021 = vperm.slane %v937, 2
  %v1022 = vperm.slane %v938, 2
  %v1023 = vperm.slane %v939, 2
  %v1024 = vperm.slane %v940, 2
  %v1025 = vperm.slane %v941, 2
  %v1026 = vmul.f32 %v1016, %v1018
  %v1027 = vmul.f32 %v1016, %v1019
  %v1028 = vmul.f32 %v1016, %v1020
  %v1029 = vmul.f32 %v1016, %v1021
  %v1030 = vmul.f32 %v1016, %v1022
  %v1031 = vmul.f32 %v1016, %v1023
  %v1032 = vmul.f32 %v1016, %v1024
  %v1033 = vmul.f32 %v1016, %v1025
  %v1034 = vadd.f32 %v1006, %v1026
  %v1035 = vadd.f32 %v1007, %v1027
  %v1036 = vadd.f32 %v1008, %v1028
  %v1037 = vadd.f32 %v1009, %v1029
  %v1038 = vadd.f32 %v1010, %v1030
  %v1039 = vadd.f32 %v1011, %v1031
  %v1040 = vadd.f32 %v1012, %v1032
  %v1041 = vadd.f32 %v1013, %v1033
  %1042 = vset.pattern.permute.xlu0 3
  %1043 = vperm.xlu0 %1042, %v950
  %v1044 = vpop.permute.xlu0 %1043
  %v1046 = vperm.slane %v934, 3
  %v1047 = vperm.slane %v935, 3
  %v1048 = vperm.slane %v936, 3
  %v1049 = vperm.slane %v937, 3
  %v1050 = vperm.slane %v938, 3
  %v1051 = vperm.slane %v939, 3
  %v1052 = vperm.slane %v940, 3
  %v1053 = vperm.slane %v941, 3
  %v1054 = vmul.f32 %v1044, %v1046
  %v1055 = vmul.f32 %v1044, %v1047
  %v1056 = vmul.f32 %v1044, %v1048
  %v1057 = vmul.f32 %v1044, %v1049
  %v1058 = vmul.f32 %v1044, %v1050
  %v1059 = vmul.f32 %v1044, %v1051
  %v1060 = vmul.f32 %v1044, %v1052
  %v1061 = vmul.f32 %v1044, %v1053
  %v1062 = vadd.f32 %v1034, %v1054
  %v1063 = vadd.f32 %v1035, %v1055
  %v1064 = vadd.f32 %v1036, %v1056
  %v1065 = vadd.f32 %v1037, %v1057
  %v1066 = vadd.f32 %v1038, %v1058
  %v1067 = vadd.f32 %v1039, %v1059
  %v1068 = vadd.f32 %v1040, %v1060
  %v1069 = vadd.f32 %v1041, %v1061
  %1070 = vset.pattern.permute.xlu0 4
  %1071 = vperm.xlu0 %1070, %v950
  %v1072 = vpop.permute.xlu0 %1071
  %v1074 = vperm.slane %v934, 4
  %v1075 = vperm.slane %v935, 4
  %v1076 = vperm.slane %v936, 4
  %v1077 = vperm.slane %v937, 4
  %v1078 = vperm.slane %v938, 4
  %v1079 = vperm.slane %v939, 4
  %v1080 = vperm.slane %v940, 4
  %v1081 = vperm.slane %v941, 4
  %v1082 = vmul.f32 %v1072, %v1074
  %v1083 = vmul.f32 %v1072, %v1075
  %v1084 = vmul.f32 %v1072, %v1076
  %v1085 = vmul.f32 %v1072, %v1077
  %v1086 = vmul.f32 %v1072, %v1078
  %v1087 = vmul.f32 %v1072, %v1079
  %v1088 = vmul.f32 %v1072, %v1080
  %v1089 = vmul.f32 %v1072, %v1081
  %v1090 = vadd.f32 %v1062, %v1082
  %v1091 = vadd.f32 %v1063, %v1083
  %v1092 = vadd.f32 %v1064, %v1084
  %v1093 = vadd.f32 %v1065, %v1085
  %v1094 = vadd.f32 %v1066, %v1086
  %v1095 = vadd.f32 %v1067, %v1087
  %v1096 = vadd.f32 %v1068, %v1088
  %v1097 = vadd.f32 %v1069, %v1089
  %1098 = vset.pattern.permute.xlu0 5
  %1099 = vperm.xlu0 %1098, %v950
  %v1100 = vpop.permute.xlu0 %1099
  %v1102 = vperm.slane %v934, 5
  %v1103 = vperm.slane %v935, 5
  %v1104 = vperm.slane %v936, 5
  %v1105 = vperm.slane %v937, 5
  %v1106 = vperm.slane %v938, 5
  %v1107 = vperm.slane %v939, 5
  %v1108 = vperm.slane %v940, 5
  %v1109 = vperm.slane %v941, 5
  %v1110 = vmul.f32 %v1100, %v1102
  %v1111 = vmul.f32 %v1100, %v1103
  %v1112 = vmul.f32 %v1100, %v1104
  %v1113 = vmul.f32 %v1100, %v1105
  %v1114 = vmul.f32 %v1100, %v1106
  %v1115 = vmul.f32 %v1100, %v1107
  %v1116 = vmul.f32 %v1100, %v1108
  %v1117 = vmul.f32 %v1100, %v1109
  %v1118 = vadd.f32 %v1090, %v1110
  %v1119 = vadd.f32 %v1091, %v1111
  %v1120 = vadd.f32 %v1092, %v1112
  %v1121 = vadd.f32 %v1093, %v1113
  %v1122 = vadd.f32 %v1094, %v1114
  %v1123 = vadd.f32 %v1095, %v1115
  %v1124 = vadd.f32 %v1096, %v1116
  %v1125 = vadd.f32 %v1097, %v1117
  %1126 = vset.pattern.permute.xlu0 6
  %1127 = vperm.xlu0 %1126, %v950
  %v1128 = vpop.permute.xlu0 %1127
  %v1130 = vperm.slane %v934, 6
  %v1131 = vperm.slane %v935, 6
  %v1132 = vperm.slane %v936, 6
  %v1133 = vperm.slane %v937, 6
  %v1134 = vperm.slane %v938, 6
  %v1135 = vperm.slane %v939, 6
  %v1136 = vperm.slane %v940, 6
  %v1137 = vperm.slane %v941, 6
  %v1138 = vmul.f32 %v1128, %v1130
  %v1139 = vmul.f32 %v1128, %v1131
  %v1140 = vmul.f32 %v1128, %v1132
  %v1141 = vmul.f32 %v1128, %v1133
  %v1142 = vmul.f32 %v1128, %v1134
  %v1143 = vmul.f32 %v1128, %v1135
  %v1144 = vmul.f32 %v1128, %v1136
  %v1145 = vmul.f32 %v1128, %v1137
  %v1146 = vadd.f32 %v1118, %v1138
  %v1147 = vadd.f32 %v1119, %v1139
  %v1148 = vadd.f32 %v1120, %v1140
  %v1149 = vadd.f32 %v1121, %v1141
  %v1150 = vadd.f32 %v1122, %v1142
  %v1151 = vadd.f32 %v1123, %v1143
  %v1152 = vadd.f32 %v1124, %v1144
  %v1153 = vadd.f32 %v1125, %v1145
  %1154 = vset.pattern.permute.xlu0 7
  %1155 = vperm.xlu0 %1154, %v950
  %v1156 = vpop.permute.xlu0 %1155
  %v1158 = vperm.slane %v934, 7
  %v1159 = vperm.slane %v935, 7
  %v1160 = vperm.slane %v936, 7
  %v1161 = vperm.slane %v937, 7
  %v1162 = vperm.slane %v938, 7
  %v1163 = vperm.slane %v939, 7
  %v1164 = vperm.slane %v940, 7
  %v1165 = vperm.slane %v941, 7
  %v1166 = vmul.f32 %v1156, %v1158
  %v1167 = vmul.f32 %v1156, %v1159
  %v1168 = vmul.f32 %v1156, %v1160
  %v1169 = vmul.f32 %v1156, %v1161
  %v1170 = vmul.f32 %v1156, %v1162
  %v1171 = vmul.f32 %v1156, %v1163
  %v1172 = vmul.f32 %v1156, %v1164
  %v1173 = vmul.f32 %v1156, %v1165
  %v1174 = vadd.f32 %v1146, %v1166
  %v1175 = vadd.f32 %v1147, %v1167
  %v1176 = vadd.f32 %v1148, %v1168
  %v1177 = vadd.f32 %v1149, %v1169
  %v1178 = vadd.f32 %v1150, %v1170
  %v1179 = vadd.f32 %v1151, %v1171
  %v1180 = vadd.f32 %v1152, %v1172
  %v1181 = vadd.f32 %v1153, %v1173
  %1182 = vset.pattern.permute.xlu0 8
  %1183 = vperm.xlu0 %1182, %v950
  %v1184 = vpop.permute.xlu0 %1183
  %v1186 = vperm.slane %v942, 0
  %v1187 = vperm.slane %v943, 0
  %v1188 = vperm.slane %v944, 0
  %v1189 = vperm.slane %v945, 0
  %v1190 = vperm.slane %v946, 0
  %v1191 = vperm.slane %v947, 0
  %v1192 = vperm.slane %v948, 0
  %v1193 = vperm.slane %v949, 0
  %v1194 = vmul.f32 %v1184, %v1186
  %v1195 = vmul.f32 %v1184, %v1187
  %v1196 = vmul.f32 %v1184, %v1188
  %v1197 = vmul.f32 %v1184, %v1189
  %v1198 = vmul.f32 %v1184, %v1190
  %v1199 = vmul.f32 %v1184, %v1191
  %v1200 = vmul.f32 %v1184, %v1192
  %v1201 = vmul.f32 %v1184, %v1193
  %v1202 = vadd.f32 %v1174, %v1194
  %v1203 = vadd.f32 %v1175, %v1195
  %v1204 = vadd.f32 %v1176, %v1196
  %v1205 = vadd.f32 %v1177, %v1197
  %v1206 = vadd.f32 %v1178, %v1198
  %v1207 = vadd.f32 %v1179, %v1199
  %v1208 = vadd.f32 %v1180, %v1200
  %v1209 = vadd.f32 %v1181, %v1201
  %1210 = vset.pattern.permute.xlu0 9
  %1211 = vperm.xlu0 %1210, %v950
  %v1212 = vpop.permute.xlu0 %1211
  %v1214 = vperm.slane %v942, 1
  %v1215 = vperm.slane %v943, 1
  %v1216 = vperm.slane %v944, 1
  %v1217 = vperm.slane %v945, 1
  %v1218 = vperm.slane %v946, 1
  %v1219 = vperm.slane %v947, 1
  %v1220 = vperm.slane %v948, 1
  %v1221 = vperm.slane %v949, 1
  %v1222 = vmul.f32 %v1212, %v1214
  %v1223 = vmul.f32 %v1212, %v1215
  %v1224 = vmul.f32 %v1212, %v1216
  %v1225 = vmul.f32 %v1212, %v1217
  %v1226 = vmul.f32 %v1212, %v1218
  %v1227 = vmul.f32 %v1212, %v1219
  %v1228 = vmul.f32 %v1212, %v1220
  %v1229 = vmul.f32 %v1212, %v1221
  %v1230 = vadd.f32 %v1202, %v1222
  %v1231 = vadd.f32 %v1203, %v1223
  %v1232 = vadd.f32 %v1204, %v1224
  %v1233 = vadd.f32 %v1205, %v1225
  %v1234 = vadd.f32 %v1206, %v1226
  %v1235 = vadd.f32 %v1207, %v1227
  %v1236 = vadd.f32 %v1208, %v1228
  %v1237 = vadd.f32 %v1209, %v1229
  %1238 = vset.pattern.permute.xlu0 10
  %1239 = vperm.xlu0 %1238, %v950
  %v1240 = vpop.permute.xlu0 %1239
  %v1242 = vperm.slane %v942, 2
  %v1243 = vperm.slane %v943, 2
  %v1244 = vperm.slane %v944, 2
  %v1245 = vperm.slane %v945, 2
  %v1246 = vperm.slane %v946, 2
  %v1247 = vperm.slane %v947, 2
  %v1248 = vperm.slane %v948, 2
  %v1249 = vperm.slane %v949, 2
  %v1250 = vmul.f32 %v1240, %v1242
  %v1251 = vmul.f32 %v1240, %v1243
  %v1252 = vmul.f32 %v1240, %v1244
  %v1253 = vmul.f32 %v1240, %v1245
  %v1254 = vmul.f32 %v1240, %v1246
  %v1255 = vmul.f32 %v1240, %v1247
  %v1256 = vmul.f32 %v1240, %v1248
  %v1257 = vmul.f32 %v1240, %v1249
  %v1258 = vadd.f32 %v1230, %v1250
  %v1259 = vadd.f32 %v1231, %v1251
  %v1260 = vadd.f32 %v1232, %v1252
  %v1261 = vadd.f32 %v1233, %v1253
  %v1262 = vadd.f32 %v1234, %v1254
  %v1263 = vadd.f32 %v1235, %v1255
  %v1264 = vadd.f32 %v1236, %v1256
  %v1265 = vadd.f32 %v1237, %v1257
  %1266 = vset.pattern.permute.xlu0 11
  %1267 = vperm.xlu0 %1266, %v950
  %v1268 = vpop.permute.xlu0 %1267
  %v1270 = vperm.slane %v942, 3
  %v1271 = vperm.slane %v943, 3
  %v1272 = vperm.slane %v944, 3
  %v1273 = vperm.slane %v945, 3
  %v1274 = vperm.slane %v946, 3
  %v1275 = vperm.slane %v947, 3
  %v1276 = vperm.slane %v948, 3
  %v1277 = vperm.slane %v949, 3
  %v1278 = vmul.f32 %v1268, %v1270
  %v1279 = vmul.f32 %v1268, %v1271
  %v1280 = vmul.f32 %v1268, %v1272
  %v1281 = vmul.f32 %v1268, %v1273
  %v1282 = vmul.f32 %v1268, %v1274
  %v1283 = vmul.f32 %v1268, %v1275
  %v1284 = vmul.f32 %v1268, %v1276
  %v1285 = vmul.f32 %v1268, %v1277
  %v1286 = vadd.f32 %v1258, %v1278
  %v1287 = vadd.f32 %v1259, %v1279
  %v1288 = vadd.f32 %v1260, %v1280
  %v1289 = vadd.f32 %v1261, %v1281
  %v1290 = vadd.f32 %v1262, %v1282
  %v1291 = vadd.f32 %v1263, %v1283
  %v1292 = vadd.f32 %v1264, %v1284
  %v1293 = vadd.f32 %v1265, %v1285
  %1294 = vset.pattern.permute.xlu0 12
  %1295 = vperm.xlu0 %1294, %v950
  %v1296 = vpop.permute.xlu0 %1295
  %v1298 = vperm.slane %v942, 4
  %v1299 = vperm.slane %v943, 4
  %v1300 = vperm.slane %v944, 4
  %v1301 = vperm.slane %v945, 4
  %v1302 = vperm.slane %v946, 4
  %v1303 = vperm.slane %v947, 4
  %v1304 = vperm.slane %v948, 4
  %v1305 = vperm.slane %v949, 4
  %v1306 = vmul.f32 %v1296, %v1298
  %v1307 = vmul.f32 %v1296, %v1299
  %v1308 = vmul.f32 %v1296, %v1300
  %v1309 = vmul.f32 %v1296, %v1301
  %v1310 = vmul.f32 %v1296, %v1302
  %v1311 = vmul.f32 %v1296, %v1303
  %v1312 = vmul.f32 %v1296, %v1304
  %v1313 = vmul.f32 %v1296, %v1305
  %v1314 = vadd.f32 %v1286, %v1306
  %v1315 = vadd.f32 %v1287, %v1307
  %v1316 = vadd.f32 %v1288, %v1308
  %v1317 = vadd.f32 %v1289, %v1309
  %v1318 = vadd.f32 %v1290, %v1310
  %v1319 = vadd.f32 %v1291, %v1311
  %v1320 = vadd.f32 %v1292, %v1312
  %v1321 = vadd.f32 %v1293, %v1313
  %1322 = vset.pattern.permute.xlu0 13
  %1323 = vperm.xlu0 %1322, %v950
  %v1324 = vpop.permute.xlu0 %1323
  %v1326 = vperm.slane %v942, 5
  %v1327 = vperm.slane %v943, 5
  %v1328 = vperm.slane %v944, 5
  %v1329 = vperm.slane %v945, 5
  %v1330 = vperm.slane %v946, 5
  %v1331 = vperm.slane %v947, 5
  %v1332 = vperm.slane %v948, 5
  %v1333 = vperm.slane %v949, 5
  %v1334 = vmul.f32 %v1324, %v1326
  %v1335 = vmul.f32 %v1324, %v1327
  %v1336 = vmul.f32 %v1324, %v1328
  %v1337 = vmul.f32 %v1324, %v1329
  %v1338 = vmul.f32 %v1324, %v1330
  %v1339 = vmul.f32 %v1324, %v1331
  %v1340 = vmul.f32 %v1324, %v1332
  %v1341 = vmul.f32 %v1324, %v1333
  %v1342 = vadd.f32 %v1314, %v1334
  %v1343 = vadd.f32 %v1315, %v1335
  %v1344 = vadd.f32 %v1316, %v1336
  %v1345 = vadd.f32 %v1317, %v1337
  %v1346 = vadd.f32 %v1318, %v1338
  %v1347 = vadd.f32 %v1319, %v1339
  %v1348 = vadd.f32 %v1320, %v1340
  %v1349 = vadd.f32 %v1321, %v1341
  %1350 = vset.pattern.permute.xlu0 14
  %1351 = vperm.xlu0 %1350, %v950
  %v1352 = vpop.permute.xlu0 %1351
  %v1354 = vperm.slane %v942, 6
  %v1355 = vperm.slane %v943, 6
  %v1356 = vperm.slane %v944, 6
  %v1357 = vperm.slane %v945, 6
  %v1358 = vperm.slane %v946, 6
  %v1359 = vperm.slane %v947, 6
  %v1360 = vperm.slane %v948, 6
  %v1361 = vperm.slane %v949, 6
  %v1362 = vmul.f32 %v1352, %v1354
  %v1363 = vmul.f32 %v1352, %v1355
  %v1364 = vmul.f32 %v1352, %v1356
  %v1365 = vmul.f32 %v1352, %v1357
  %v1366 = vmul.f32 %v1352, %v1358
  %v1367 = vmul.f32 %v1352, %v1359
  %v1368 = vmul.f32 %v1352, %v1360
  %v1369 = vmul.f32 %v1352, %v1361
  %v1370 = vadd.f32 %v1342, %v1362
  %v1371 = vadd.f32 %v1343, %v1363
  %v1372 = vadd.f32 %v1344, %v1364
  %v1373 = vadd.f32 %v1345, %v1365
  %v1374 = vadd.f32 %v1346, %v1366
  %v1375 = vadd.f32 %v1347, %v1367
  %v1376 = vadd.f32 %v1348, %v1368
  %v1377 = vadd.f32 %v1349, %v1369
  %1378 = vset.pattern.permute.xlu0 15
  %1379 = vperm.xlu0 %1378, %v950
  %v1380 = vpop.permute.xlu0 %1379
  %v1382 = vperm.slane %v942, 7
  %v1383 = vperm.slane %v943, 7
  %v1384 = vperm.slane %v944, 7
  %v1385 = vperm.slane %v945, 7
  %v1386 = vperm.slane %v946, 7
  %v1387 = vperm.slane %v947, 7
  %v1388 = vperm.slane %v948, 7
  %v1389 = vperm.slane %v949, 7
  %v1390 = vmul.f32 %v1380, %v1382
  %v1391 = vmul.f32 %v1380, %v1383
  %v1392 = vmul.f32 %v1380, %v1384
  %v1393 = vmul.f32 %v1380, %v1385
  %v1394 = vmul.f32 %v1380, %v1386
  %v1395 = vmul.f32 %v1380, %v1387
  %v1396 = vmul.f32 %v1380, %v1388
  %v1397 = vmul.f32 %v1380, %v1389
  %v1398 = vadd.f32 %v1370, %v1390
  %v1399 = vadd.f32 %v1371, %v1391
  %v1400 = vadd.f32 %v1372, %v1392
  %v1401 = vadd.f32 %v1373, %v1393
  %v1402 = vadd.f32 %v1374, %v1394
  %v1403 = vadd.f32 %v1375, %v1395
  %v1404 = vadd.f32 %v1376, %v1396
  %v1405 = vadd.f32 %v1377, %v1397
  %v1406 = vxor.u32 %v1398, 2147483648
  %v1407 = vxor.u32 %v1399, 2147483648
  %v1408 = vxor.u32 %v1400, 2147483648
  %v1409 = vxor.u32 %v1401, 2147483648
  %v1410 = vxor.u32 %v1402, 2147483648
  %v1411 = vxor.u32 %v1403, 2147483648
  %v1412 = vxor.u32 %v1404, 2147483648
  %v1413 = vxor.u32 %v1405, 2147483648
  %v1414 = vmul.f32 %v1406, 1.442695
  %v1415 = vpow.pop %v1414
  %v1416 = vmul.f32 %v1407, 1.442695
  %v1417 = vpow.pop %v1416
  %v1418 = vmul.f32 %v1408, 1.442695
  %v1419 = vpow.pop %v1418
  %v1420 = vmul.f32 %v1409, 1.442695
  %v1421 = vpow.pop %v1420
  %v1422 = vmul.f32 %v1410, 1.442695
  %v1423 = vpow.pop %v1422
  %v1424 = vmul.f32 %v1411, 1.442695
  %v1425 = vpow.pop %v1424
  %v1426 = vmul.f32 %v1412, 1.442695
  %v1427 = vpow.pop %v1426
  %v1428 = vmul.f32 %v1413, 1.442695
  %v1429 = vpow.pop %v1428
  %v1430 = vadd.f32 %v1415, 1.0
  %v1431 = vadd.f32 %v1417, 1.0
  %v1432 = vadd.f32 %v1419, 1.0
  %v1433 = vadd.f32 %v1421, 1.0
  %v1434 = vadd.f32 %v1423, 1.0
  %v1435 = vadd.f32 %v1425, 1.0
  %v1436 = vadd.f32 %v1427, 1.0
  %v1437 = vadd.f32 %v1429, 1.0
  %v1438 = vrcp.pop %v1430
  %v1439 = vmul.f32 %v1430, %v1438
  %v1440 = vsub.f32 1.0, %v1439
  %v1441 = vmul.f32 %v1438, %v1440
  %v1442 = vadd.f32 %v1438, %v1441
  %vm1443 = vweird.f32 %v1430
  %vm1444 = vweird.f32 %v1438
  %vm1445 = vmor %vm1443, %vm1444
  %v1446 = vsel %vm1445, %v1438, %v1442
  %v1447 = vand.u32 2147483647, %v1430
  %vm1448 = vcmp.eq.f32.partialorder %v1447, 8.507059e+37
  %v1449 = vand.u32 %v1430, 2147483648
  %v1450 = vor.u32 1.1754944e-38, %v1449
  %v1451 = vsel %vm1448, %v1450, %v1446
  %v1452 = vmul.f32 1.0, %v1451
  %v1453 = vrcp.pop %v1431
  %v1454 = vmul.f32 %v1431, %v1453
  %v1455 = vsub.f32 1.0, %v1454
  %v1456 = vmul.f32 %v1453, %v1455
  %v1457 = vadd.f32 %v1453, %v1456
  %vm1458 = vweird.f32 %v1431
  %vm1459 = vweird.f32 %v1453
  %vm1460 = vmor %vm1458, %vm1459
  %v1461 = vsel %vm1460, %v1453, %v1457
  %v1462 = vand.u32 2147483647, %v1431
  %vm1463 = vcmp.eq.f32.partialorder %v1462, 8.507059e+37
  %v1464 = vand.u32 %v1431, 2147483648
  %v1465 = vor.u32 1.1754944e-38, %v1464
  %v1466 = vsel %vm1463, %v1465, %v1461
  %v1467 = vmul.f32 1.0, %v1466
  %v1468 = vrcp.pop %v1432
  %v1469 = vmul.f32 %v1432, %v1468
  %v1470 = vsub.f32 1.0, %v1469
  %v1471 = vmul.f32 %v1468, %v1470
  %v1472 = vadd.f32 %v1468, %v1471
  %vm1473 = vweird.f32 %v1432
  %vm1474 = vweird.f32 %v1468
  %vm1475 = vmor %vm1473, %vm1474
  %v1476 = vsel %vm1475, %v1468, %v1472
  %v1477 = vand.u32 2147483647, %v1432
  %vm1478 = vcmp.eq.f32.partialorder %v1477, 8.507059e+37
  %v1479 = vand.u32 %v1432, 2147483648
  %v1480 = vor.u32 1.1754944e-38, %v1479
  %v1481 = vsel %vm1478, %v1480, %v1476
  %v1482 = vmul.f32 1.0, %v1481
  %v1483 = vrcp.pop %v1433
  %v1484 = vmul.f32 %v1433, %v1483
  %v1485 = vsub.f32 1.0, %v1484
  %v1486 = vmul.f32 %v1483, %v1485
  %v1487 = vadd.f32 %v1483, %v1486
  %vm1488 = vweird.f32 %v1433
  %vm1489 = vweird.f32 %v1483
  %vm1490 = vmor %vm1488, %vm1489
  %v1491 = vsel %vm1490, %v1483, %v1487
  %v1492 = vand.u32 2147483647, %v1433
  %vm1493 = vcmp.eq.f32.partialorder %v1492, 8.507059e+37
  %v1494 = vand.u32 %v1433, 2147483648
  %v1495 = vor.u32 1.1754944e-38, %v1494
  %v1496 = vsel %vm1493, %v1495, %v1491
  %v1497 = vmul.f32 1.0, %v1496
  %v1498 = vrcp.pop %v1434
  %v1499 = vmul.f32 %v1434, %v1498
  %v1500 = vsub.f32 1.0, %v1499
  %v1501 = vmul.f32 %v1498, %v1500
  %v1502 = vadd.f32 %v1498, %v1501
  %vm1503 = vweird.f32 %v1434
  %vm1504 = vweird.f32 %v1498
  %vm1505 = vmor %vm1503, %vm1504
  %v1506 = vsel %vm1505, %v1498, %v1502
  %v1507 = vand.u32 2147483647, %v1434
  %vm1508 = vcmp.eq.f32.partialorder %v1507, 8.507059e+37
  %v1509 = vand.u32 %v1434, 2147483648
  %v1510 = vor.u32 1.1754944e-38, %v1509
  %v1511 = vsel %vm1508, %v1510, %v1506
  %v1512 = vmul.f32 1.0, %v1511
  %v1513 = vrcp.pop %v1435
  %v1514 = vmul.f32 %v1435, %v1513
  %v1515 = vsub.f32 1.0, %v1514
  %v1516 = vmul.f32 %v1513, %v1515
  %v1517 = vadd.f32 %v1513, %v1516
  %vm1518 = vweird.f32 %v1435
  %vm1519 = vweird.f32 %v1513
  %vm1520 = vmor %vm1518, %vm1519
  %v1521 = vsel %vm1520, %v1513, %v1517
  %v1522 = vand.u32 2147483647, %v1435
  %vm1523 = vcmp.eq.f32.partialorder %v1522, 8.507059e+37
  %v1524 = vand.u32 %v1435, 2147483648
  %v1525 = vor.u32 1.1754944e-38, %v1524
  %v1526 = vsel %vm1523, %v1525, %v1521
  %v1527 = vmul.f32 1.0, %v1526
  %v1528 = vrcp.pop %v1436
  %v1529 = vmul.f32 %v1436, %v1528
  %v1530 = vsub.f32 1.0, %v1529
  %v1531 = vmul.f32 %v1528, %v1530
  %v1532 = vadd.f32 %v1528, %v1531
  %vm1533 = vweird.f32 %v1436
  %vm1534 = vweird.f32 %v1528
  %vm1535 = vmor %vm1533, %vm1534
  %v1536 = vsel %vm1535, %v1528, %v1532
  %v1537 = vand.u32 2147483647, %v1436
  %vm1538 = vcmp.eq.f32.partialorder %v1537, 8.507059e+37
  %v1539 = vand.u32 %v1436, 2147483648
  %v1540 = vor.u32 1.1754944e-38, %v1539
  %v1541 = vsel %vm1538, %v1540, %v1536
  %v1542 = vmul.f32 1.0, %v1541
  %v1543 = vrcp.pop %v1437
  %v1544 = vmul.f32 %v1437, %v1543
  %v1545 = vsub.f32 1.0, %v1544
  %v1546 = vmul.f32 %v1543, %v1545
  %v1547 = vadd.f32 %v1543, %v1546
  %vm1548 = vweird.f32 %v1437
  %vm1549 = vweird.f32 %v1543
  %vm1550 = vmor %vm1548, %vm1549
  %v1551 = vsel %vm1550, %v1543, %v1547
  %v1552 = vand.u32 2147483647, %v1437
  %vm1553 = vcmp.eq.f32.partialorder %v1552, 8.507059e+37
  %v1554 = vand.u32 %v1437, 2147483648
  %v1555 = vor.u32 1.1754944e-38, %v1554
  %v1556 = vsel %vm1553, %v1555, %v1551
  %v1557 = vmul.f32 1.0, %v1556
  %v1558 = vmul.f32 %v1398, %v1452
  %v1559 = vmul.f32 %v1399, %v1467
  %v1560 = vmul.f32 %v1400, %v1482
  %v1561 = vmul.f32 %v1401, %v1497
  %v1562 = vmul.f32 %v1402, %v1512
  %v1563 = vmul.f32 %v1403, %v1527
  %v1564 = vmul.f32 %v1404, %v1542
  %v1565 = vmul.f32 %v1405, %v1557
  %v1566 = vsel %vm764, %v1558, 0.0
  %v1567 = vsel %vm765, %v1559, 0.0
  %v1568 = vsel %vm766, %v1560, 0.0
  %v1569 = vsel %vm767, %v1561, 0.0
  %v1570 = vsel %vm768, %v1562, 0.0
  %v1571 = vsel %vm769, %v1563, 0.0
  %v1572 = vsel %vm770, %v1564, 0.0
  %v1573 = vsel %vm771, %v1565, 0.0
  %v1574 = vadd.f32 %v1566, %v1567
  %v1575 = vadd.f32 %v1574, %v1568
  %v1576 = vadd.f32 %v1575, %v1569
  %v1577 = vadd.f32 %v1576, %v1570
  %v1578 = vadd.f32 %v1577, %v1571
  %v1579 = vadd.f32 %v1578, %v1572
  %v1580 = vadd.f32 %v1579, %v1573
  %1581 = vadd.xlane.f32.xlu0 %v1580
  %v1582 = vpop.xlane.xlu0 %1581
  %v1583 = vmul.f32 %v1582, 0.001
  %v1584 = vsub.f32 %v1558, %v1583
  %v1585 = vsub.f32 %v1559, %v1583
  %v1586 = vsub.f32 %v1560, %v1583
  %v1587 = vsub.f32 %v1561, %v1583
  %v1588 = vsub.f32 %v1562, %v1583
  %v1589 = vsub.f32 %v1563, %v1583
  %v1590 = vsub.f32 %v1564, %v1583
  %v1591 = vsub.f32 %v1565, %v1583
  %v1592 = vsel %vm764, %v1584, 0.0
  %v1593 = vsel %vm765, %v1585, 0.0
  %v1594 = vsel %vm766, %v1586, 0.0
  %v1595 = vsel %vm767, %v1587, 0.0
  %v1596 = vsel %vm768, %v1588, 0.0
  %v1597 = vsel %vm769, %v1589, 0.0
  %v1598 = vsel %vm770, %v1590, 0.0
  %v1599 = vsel %vm771, %v1591, 0.0
  %v1600 = vmul.f32 %v1592, %v1592
  %v1601 = vmul.f32 %v1593, %v1593
  %v1602 = vmul.f32 %v1594, %v1594
  %v1603 = vmul.f32 %v1595, %v1595
  %v1604 = vmul.f32 %v1596, %v1596
  %v1605 = vmul.f32 %v1597, %v1597
  %v1606 = vmul.f32 %v1598, %v1598
  %v1607 = vmul.f32 %v1599, %v1599
  %v1608 = vadd.f32 %v1600, %v1601
  %v1609 = vadd.f32 %v1608, %v1602
  %v1610 = vadd.f32 %v1609, %v1603
  %v1611 = vadd.f32 %v1610, %v1604
  %v1612 = vadd.f32 %v1611, %v1605
  %v1613 = vadd.f32 %v1612, %v1606
  %v1614 = vadd.f32 %v1613, %v1607
  %1615 = vadd.xlane.f32.xlu0 %v1614
  %v1616 = vpop.xlane.xlu0 %1615
  %v1617 = vmul.f32 %v1616, 0.001
  %v1618 = vadd.f32 %v1617, 1e-05
  %v1619 = vrsqrt.pop %v1618
  %v1620 = vmul.f32 %v1619, %v1618
  %v1621 = vmul.f32 %v1620, %v1619
  %v1622 = vmul.f32 0.5, %v1621
  %v1623 = vsub.f32 1.5, %v1622
  %v1624 = vmul.f32 %v1619, %v1623
  %vm1625 = vweird.f32 %v1618
  %vm1626 = vweird.f32 %v1619
  %vm1627 = vmor %vm1625, %vm1626
  %v1628 = vsel %vm1627, %v1619, %v1624
  %v1629 = vmul.f32 %v951, %v1628
  %1631 = vset.pattern.permute.xlu0 1
  %1632 = vperm.xlu0 %1631, %v1629
  %v1633 = vpop.permute.xlu0 %1632
  %v1635 = vmul.f32 %v1633, %v1584
  %v1636 = vmul.f32 %v1633, %v1585
  %v1637 = vmul.f32 %v1633, %v1586
  %v1638 = vmul.f32 %v1633, %v1587
  %v1639 = vmul.f32 %v1633, %v1588
  %v1640 = vmul.f32 %v1633, %v1589
  %v1641 = vmul.f32 %v1633, %v1590
  %v1642 = vmul.f32 %v1633, %v1591
  %1643 = vset.pattern.permute.xlu0 2
  %1644 = vperm.xlu0 %1643, %v951
  %v1645 = vpop.permute.xlu0 %1644
  %v1647 = vadd.f32 %v1635, %v1645
  %v1648 = vadd.f32 %v1636, %v1645
  %v1649 = vadd.f32 %v1637, %v1645
  %v1650 = vadd.f32 %v1638, %v1645
  %v1651 = vadd.f32 %v1639, %v1645
  %v1652 = vadd.f32 %v1640, %v1645
  %v1653 = vadd.f32 %v1641, %v1645
  %v1654 = vadd.f32 %v1642, %v1645
  %v1655 = vld [vmem:[%s0 + $0x30] sm:$0xf]
  %v1656 = vld [vmem:[%s0 + $0x38] sm:$0xf]
  %1658 = vset.pattern.permute.xlu0 0
  %1659 = vperm.xlu0 %1658, %v1656
  %v1660 = vpop.permute.xlu0 %1659
  %1663 = vset.pattern.permute.xlu0 0
  %1664 = vperm.xlu0 %1663, %v1655
  %v1665 = vpop.permute.xlu0 %1664
  %v1667 = vperm.slane %v1647, 0
  %v1668 = vperm.slane %v1648, 0
  %v1669 = vperm.slane %v1649, 0
  %v1670 = vperm.slane %v1650, 0
  %v1671 = vperm.slane %v1651, 0
  %v1672 = vperm.slane %v1652, 0
  %v1673 = vperm.slane %v1653, 0
  %v1674 = vperm.slane %v1654, 0
  %v1675 = vmul.f32 %v1665, %v1667
  %v1676 = vmul.f32 %v1665, %v1668
  %v1677 = vmul.f32 %v1665, %v1669
  %v1678 = vmul.f32 %v1665, %v1670
  %v1679 = vmul.f32 %v1665, %v1671
  %v1680 = vmul.f32 %v1665, %v1672
  %v1681 = vmul.f32 %v1665, %v1673
  %v1682 = vmul.f32 %v1665, %v1674
  %v1683 = vadd.f32 %v1660, %v1675
  %v1684 = vadd.f32 %v1660, %v1676
  %v1685 = vadd.f32 %v1660, %v1677
  %v1686 = vadd.f32 %v1660, %v1678
  %v1687 = vadd.f32 %v1660, %v1679
  %v1688 = vadd.f32 %v1660, %v1680
  %v1689 = vadd.f32 %v1660, %v1681
  %v1690 = vadd.f32 %v1660, %v1682
  %1691 = vset.pattern.permute.xlu0 1
  %1692 = vperm.xlu0 %1691, %v1655
  %v1693 = vpop.permute.xlu0 %1692
  %v1695 = vperm.slane %v1647, 1
  %v1696 = vperm.slane %v1648, 1
  %v1697 = vperm.slane %v1649, 1
  %v1698 = vperm.slane %v1650, 1
  %v1699 = vperm.slane %v1651, 1
  %v1700 = vperm.slane %v1652, 1
  %v1701 = vperm.slane %v1653, 1
  %v1702 = vperm.slane %v1654, 1
  %v1703 = vmul.f32 %v1693, %v1695
  %v1704 = vmul.f32 %v1693, %v1696
  %v1705 = vmul.f32 %v1693, %v1697
  %v1706 = vmul.f32 %v1693, %v1698
  %v1707 = vmul.f32 %v1693, %v1699
  %v1708 = vmul.f32 %v1693, %v1700
  %v1709 = vmul.f32 %v1693, %v1701
  %v1710 = vmul.f32 %v1693, %v1702
  %v1711 = vadd.f32 %v1683, %v1703
  %v1712 = vadd.f32 %v1684, %v1704
  %v1713 = vadd.f32 %v1685, %v1705
  %v1714 = vadd.f32 %v1686, %v1706
  %v1715 = vadd.f32 %v1687, %v1707
  %v1716 = vadd.f32 %v1688, %v1708
  %v1717 = vadd.f32 %v1689, %v1709
  %v1718 = vadd.f32 %v1690, %v1710
  %1719 = vset.pattern.permute.xlu0 2
  %1720 = vperm.xlu0 %1719, %v1655
  %v1721 = vpop.permute.xlu0 %1720
  %v1723 = vperm.slane %v1647, 2
  %v1724 = vperm.slane %v1648, 2
  %v1725 = vperm.slane %v1649, 2
  %v1726 = vperm.slane %v1650, 2
  %v1727 = vperm.slane %v1651, 2
  %v1728 = vperm.slane %v1652, 2
  %v1729 = vperm.slane %v1653, 2
  %v1730 = vperm.slane %v1654, 2
  %v1731 = vmul.f32 %v1721, %v1723
  %v1732 = vmul.f32 %v1721, %v1724
  %v1733 = vmul.f32 %v1721, %v1725
  %v1734 = vmul.f32 %v1721, %v1726
  %v1735 = vmul.f32 %v1721, %v1727
  %v1736 = vmul.f32 %v1721, %v1728
  %v1737 = vmul.f32 %v1721, %v1729
  %v1738 = vmul.f32 %v1721, %v1730
  %v1739 = vadd.f32 %v1711, %v1731
  %v1740 = vadd.f32 %v1712, %v1732
  %v1741 = vadd.f32 %v1713, %v1733
  %v1742 = vadd.f32 %v1714, %v1734
  %v1743 = vadd.f32 %v1715, %v1735
  %v1744 = vadd.f32 %v1716, %v1736
  %v1745 = vadd.f32 %v1717, %v1737
  %v1746 = vadd.f32 %v1718, %v1738
  %1747 = vset.pattern.permute.xlu0 3
  %1748 = vperm.xlu0 %1747, %v1655
  %v1749 = vpop.permute.xlu0 %1748
  %v1751 = vperm.slane %v1647, 3
  %v1752 = vperm.slane %v1648, 3
  %v1753 = vperm.slane %v1649, 3
  %v1754 = vperm.slane %v1650, 3
  %v1755 = vperm.slane %v1651, 3
  %v1756 = vperm.slane %v1652, 3
  %v1757 = vperm.slane %v1653, 3
  %v1758 = vperm.slane %v1654, 3
  %v1759 = vmul.f32 %v1749, %v1751
  %v1760 = vmul.f32 %v1749, %v1752
  %v1761 = vmul.f32 %v1749, %v1753
  %v1762 = vmul.f32 %v1749, %v1754
  %v1763 = vmul.f32 %v1749, %v1755
  %v1764 = vmul.f32 %v1749, %v1756
  %v1765 = vmul.f32 %v1749, %v1757
  %v1766 = vmul.f32 %v1749, %v1758
  %v1767 = vadd.f32 %v1739, %v1759
  %v1768 = vadd.f32 %v1740, %v1760
  %v1769 = vadd.f32 %v1741, %v1761
  %v1770 = vadd.f32 %v1742, %v1762
  %v1771 = vadd.f32 %v1743, %v1763
  %v1772 = vadd.f32 %v1744, %v1764
  %v1773 = vadd.f32 %v1745, %v1765
  %v1774 = vadd.f32 %v1746, %v1766
  %1775 = vset.pattern.permute.xlu0 4
  %1776 = vperm.xlu0 %1775, %v1655
  %v1777 = vpop.permute.xlu0 %1776
  %v1779 = vperm.slane %v1647, 4
  %v1780 = vperm.slane %v1648, 4
  %v1781 = vperm.slane %v1649, 4
  %v1782 = vperm.slane %v1650, 4
  %v1783 = vperm.slane %v1651, 4
  %v1784 = vperm.slane %v1652, 4
  %v1785 = vperm.slane %v1653, 4
  %v1786 = vperm.slane %v1654, 4
  %v1787 = vmul.f32 %v1777, %v1779
  %v1788 = vmul.f32 %v1777, %v1780
  %v1789 = vmul.f32 %v1777, %v1781
  %v1790 = vmul.f32 %v1777, %v1782
  %v1791 = vmul.f32 %v1777, %v1783
  %v1792 = vmul.f32 %v1777, %v1784
  %v1793 = vmul.f32 %v1777, %v1785
  %v1794 = vmul.f32 %v1777, %v1786
  %v1795 = vadd.f32 %v1767, %v1787
  %v1796 = vadd.f32 %v1768, %v1788
  %v1797 = vadd.f32 %v1769, %v1789
  %v1798 = vadd.f32 %v1770, %v1790
  %v1799 = vadd.f32 %v1771, %v1791
  %v1800 = vadd.f32 %v1772, %v1792
  %v1801 = vadd.f32 %v1773, %v1793
  %v1802 = vadd.f32 %v1774, %v1794
  %1803 = vset.pattern.permute.xlu0 5
  %1804 = vperm.xlu0 %1803, %v1655
  %v1805 = vpop.permute.xlu0 %1804
  %v1807 = vperm.slane %v1647, 5
  %v1808 = vperm.slane %v1648, 5
  %v1809 = vperm.slane %v1649, 5
  %v1810 = vperm.slane %v1650, 5
  %v1811 = vperm.slane %v1651, 5
  %v1812 = vperm.slane %v1652, 5
  %v1813 = vperm.slane %v1653, 5
  %v1814 = vperm.slane %v1654, 5
  %v1815 = vmul.f32 %v1805, %v1807
  %v1816 = vmul.f32 %v1805, %v1808
  %v1817 = vmul.f32 %v1805, %v1809
  %v1818 = vmul.f32 %v1805, %v1810
  %v1819 = vmul.f32 %v1805, %v1811
  %v1820 = vmul.f32 %v1805, %v1812
  %v1821 = vmul.f32 %v1805, %v1813
  %v1822 = vmul.f32 %v1805, %v1814
  %v1823 = vadd.f32 %v1795, %v1815
  %v1824 = vadd.f32 %v1796, %v1816
  %v1825 = vadd.f32 %v1797, %v1817
  %v1826 = vadd.f32 %v1798, %v1818
  %v1827 = vadd.f32 %v1799, %v1819
  %v1828 = vadd.f32 %v1800, %v1820
  %v1829 = vadd.f32 %v1801, %v1821
  %v1830 = vadd.f32 %v1802, %v1822
  %1831 = vset.pattern.permute.xlu0 6
  %1832 = vperm.xlu0 %1831, %v1655
  %v1833 = vpop.permute.xlu0 %1832
  %v1835 = vperm.slane %v1647, 6
  %v1836 = vperm.slane %v1648, 6
  %v1837 = vperm.slane %v1649, 6
  %v1838 = vperm.slane %v1650, 6
  %v1839 = vperm.slane %v1651, 6
  %v1840 = vperm.slane %v1652, 6
  %v1841 = vperm.slane %v1653, 6
  %v1842 = vperm.slane %v1654, 6
  %v1843 = vmul.f32 %v1833, %v1835
  %v1844 = vmul.f32 %v1833, %v1836
  %v1845 = vmul.f32 %v1833, %v1837
  %v1846 = vmul.f32 %v1833, %v1838
  %v1847 = vmul.f32 %v1833, %v1839
  %v1848 = vmul.f32 %v1833, %v1840
  %v1849 = vmul.f32 %v1833, %v1841
  %v1850 = vmul.f32 %v1833, %v1842
  %v1851 = vadd.f32 %v1823, %v1843
  %v1852 = vadd.f32 %v1824, %v1844
  %v1853 = vadd.f32 %v1825, %v1845
  %v1854 = vadd.f32 %v1826, %v1846
  %v1855 = vadd.f32 %v1827, %v1847
  %v1856 = vadd.f32 %v1828, %v1848
  %v1857 = vadd.f32 %v1829, %v1849
  %v1858 = vadd.f32 %v1830, %v1850
  %1859 = vset.pattern.permute.xlu0 7
  %1860 = vperm.xlu0 %1859, %v1655
  %v1861 = vpop.permute.xlu0 %1860
  %v1863 = vperm.slane %v1647, 7
  %v1864 = vperm.slane %v1648, 7
  %v1865 = vperm.slane %v1649, 7
  %v1866 = vperm.slane %v1650, 7
  %v1867 = vperm.slane %v1651, 7
  %v1868 = vperm.slane %v1652, 7
  %v1869 = vperm.slane %v1653, 7
  %v1870 = vperm.slane %v1654, 7
  %v1871 = vmul.f32 %v1861, %v1863
  %v1872 = vmul.f32 %v1861, %v1864
  %v1873 = vmul.f32 %v1861, %v1865
  %v1874 = vmul.f32 %v1861, %v1866
  %v1875 = vmul.f32 %v1861, %v1867
  %v1876 = vmul.f32 %v1861, %v1868
  %v1877 = vmul.f32 %v1861, %v1869
  %v1878 = vmul.f32 %v1861, %v1870
  %v1879 = vadd.f32 %v1851, %v1871
  %v1880 = vadd.f32 %v1852, %v1872
  %v1881 = vadd.f32 %v1853, %v1873
  %v1882 = vadd.f32 %v1854, %v1874
  %v1883 = vadd.f32 %v1855, %v1875
  %v1884 = vadd.f32 %v1856, %v1876
  %v1885 = vadd.f32 %v1857, %v1877
  %v1886 = vadd.f32 %v1858, %v1878
  %v1887 = vxor.u32 %v1879, 2147483648
  %v1888 = vxor.u32 %v1880, 2147483648
  %v1889 = vxor.u32 %v1881, 2147483648
  %v1890 = vxor.u32 %v1882, 2147483648
  %v1891 = vxor.u32 %v1883, 2147483648
  %v1892 = vxor.u32 %v1884, 2147483648
  %v1893 = vxor.u32 %v1885, 2147483648
  %v1894 = vxor.u32 %v1886, 2147483648
  %v1895 = vmul.f32 %v1887, 1.442695
  %v1896 = vpow.pop %v1895
  %v1897 = vmul.f32 %v1888, 1.442695
  %v1898 = vpow.pop %v1897
  %v1899 = vmul.f32 %v1889, 1.442695
  %v1900 = vpow.pop %v1899
  %v1901 = vmul.f32 %v1890, 1.442695
  %v1902 = vpow.pop %v1901
  %v1903 = vmul.f32 %v1891, 1.442695
  %v1904 = vpow.pop %v1903
  %v1905 = vmul.f32 %v1892, 1.442695
  %v1906 = vpow.pop %v1905
  %v1907 = vmul.f32 %v1893, 1.442695
  %v1908 = vpow.pop %v1907
  %v1909 = vmul.f32 %v1894, 1.442695
  %v1910 = vpow.pop %v1909
  %v1911 = vadd.f32 %v1896, 1.0
  %v1912 = vadd.f32 %v1898, 1.0
  %v1913 = vadd.f32 %v1900, 1.0
  %v1914 = vadd.f32 %v1902, 1.0
  %v1915 = vadd.f32 %v1904, 1.0
  %v1916 = vadd.f32 %v1906, 1.0
  %v1917 = vadd.f32 %v1908, 1.0
  %v1918 = vadd.f32 %v1910, 1.0
  %v1919 = vrcp.pop %v1911
  %v1920 = vmul.f32 %v1911, %v1919
  %v1921 = vsub.f32 1.0, %v1920
  %v1922 = vmul.f32 %v1919, %v1921
  %v1923 = vadd.f32 %v1919, %v1922
  %vm1924 = vweird.f32 %v1911
  %vm1925 = vweird.f32 %v1919
  %vm1926 = vmor %vm1924, %vm1925
  %v1927 = vsel %vm1926, %v1919, %v1923
  %v1928 = vand.u32 2147483647, %v1911
  %vm1929 = vcmp.eq.f32.partialorder %v1928, 8.507059e+37
  %v1930 = vand.u32 %v1911, 2147483648
  %v1931 = vor.u32 1.1754944e-38, %v1930
  %v1932 = vsel %vm1929, %v1931, %v1927
  %v1933 = vmul.f32 1.0, %v1932
  %v1934 = vrcp.pop %v1912
  %v1935 = vmul.f32 %v1912, %v1934
  %v1936 = vsub.f32 1.0, %v1935
  %v1937 = vmul.f32 %v1934, %v1936
  %v1938 = vadd.f32 %v1934, %v1937
  %vm1939 = vweird.f32 %v1912
  %vm1940 = vweird.f32 %v1934
  %vm1941 = vmor %vm1939, %vm1940
  %v1942 = vsel %vm1941, %v1934, %v1938
  %v1943 = vand.u32 2147483647, %v1912
  %vm1944 = vcmp.eq.f32.partialorder %v1943, 8.507059e+37
  %v1945 = vand.u32 %v1912, 2147483648
  %v1946 = vor.u32 1.1754944e-38, %v1945
  %v1947 = vsel %vm1944, %v1946, %v1942
  %v1948 = vmul.f32 1.0, %v1947
  %v1949 = vrcp.pop %v1913
  %v1950 = vmul.f32 %v1913, %v1949
  %v1951 = vsub.f32 1.0, %v1950
  %v1952 = vmul.f32 %v1949, %v1951
  %v1953 = vadd.f32 %v1949, %v1952
  %vm1954 = vweird.f32 %v1913
  %vm1955 = vweird.f32 %v1949
  %vm1956 = vmor %vm1954, %vm1955
  %v1957 = vsel %vm1956, %v1949, %v1953
  %v1958 = vand.u32 2147483647, %v1913
  %vm1959 = vcmp.eq.f32.partialorder %v1958, 8.507059e+37
  %v1960 = vand.u32 %v1913, 2147483648
  %v1961 = vor.u32 1.1754944e-38, %v1960
  %v1962 = vsel %vm1959, %v1961, %v1957
  %v1963 = vmul.f32 1.0, %v1962
  %v1964 = vrcp.pop %v1914
  %v1965 = vmul.f32 %v1914, %v1964
  %v1966 = vsub.f32 1.0, %v1965
  %v1967 = vmul.f32 %v1964, %v1966
  %v1968 = vadd.f32 %v1964, %v1967
  %vm1969 = vweird.f32 %v1914
  %vm1970 = vweird.f32 %v1964
  %vm1971 = vmor %vm1969, %vm1970
  %v1972 = vsel %vm1971, %v1964, %v1968
  %v1973 = vand.u32 2147483647, %v1914
  %vm1974 = vcmp.eq.f32.partialorder %v1973, 8.507059e+37
  %v1975 = vand.u32 %v1914, 2147483648
  %v1976 = vor.u32 1.1754944e-38, %v1975
  %v1977 = vsel %vm1974, %v1976, %v1972
  %v1978 = vmul.f32 1.0, %v1977
  %v1979 = vrcp.pop %v1915
  %v1980 = vmul.f32 %v1915, %v1979
  %v1981 = vsub.f32 1.0, %v1980
  %v1982 = vmul.f32 %v1979, %v1981
  %v1983 = vadd.f32 %v1979, %v1982
  %vm1984 = vweird.f32 %v1915
  %vm1985 = vweird.f32 %v1979
  %vm1986 = vmor %vm1984, %vm1985
  %v1987 = vsel %vm1986, %v1979, %v1983
  %v1988 = vand.u32 2147483647, %v1915
  %vm1989 = vcmp.eq.f32.partialorder %v1988, 8.507059e+37
  %v1990 = vand.u32 %v1915, 2147483648
  %v1991 = vor.u32 1.1754944e-38, %v1990
  %v1992 = vsel %vm1989, %v1991, %v1987
  %v1993 = vmul.f32 1.0, %v1992
  %v1994 = vrcp.pop %v1916
  %v1995 = vmul.f32 %v1916, %v1994
  %v1996 = vsub.f32 1.0, %v1995
  %v1997 = vmul.f32 %v1994, %v1996
  %v1998 = vadd.f32 %v1994, %v1997
  %vm1999 = vweird.f32 %v1916
  %vm2000 = vweird.f32 %v1994
  %vm2001 = vmor %vm1999, %vm2000
  %v2002 = vsel %vm2001, %v1994, %v1998
  %v2003 = vand.u32 2147483647, %v1916
  %vm2004 = vcmp.eq.f32.partialorder %v2003, 8.507059e+37
  %v2005 = vand.u32 %v1916, 2147483648
  %v2006 = vor.u32 1.1754944e-38, %v2005
  %v2007 = vsel %vm2004, %v2006, %v2002
  %v2008 = vmul.f32 1.0, %v2007
  %v2009 = vrcp.pop %v1917
  %v2010 = vmul.f32 %v1917, %v2009
  %v2011 = vsub.f32 1.0, %v2010
  %v2012 = vmul.f32 %v2009, %v2011
  %v2013 = vadd.f32 %v2009, %v2012
  %vm2014 = vweird.f32 %v1917
  %vm2015 = vweird.f32 %v2009
  %vm2016 = vmor %vm2014, %vm2015
  %v2017 = vsel %vm2016, %v2009, %v2013
  %v2018 = vand.u32 2147483647, %v1917
  %vm2019 = vcmp.eq.f32.partialorder %v2018, 8.507059e+37
  %v2020 = vand.u32 %v1917, 2147483648
  %v2021 = vor.u32 1.1754944e-38, %v2020
  %v2022 = vsel %vm2019, %v2021, %v2017
  %v2023 = vmul.f32 1.0, %v2022
  %v2024 = vrcp.pop %v1918
  %v2025 = vmul.f32 %v1918, %v2024
  %v2026 = vsub.f32 1.0, %v2025
  %v2027 = vmul.f32 %v2024, %v2026
  %v2028 = vadd.f32 %v2024, %v2027
  %vm2029 = vweird.f32 %v1918
  %vm2030 = vweird.f32 %v2024
  %vm2031 = vmor %vm2029, %vm2030
  %v2032 = vsel %vm2031, %v2024, %v2028
  %v2033 = vand.u32 2147483647, %v1918
  %vm2034 = vcmp.eq.f32.partialorder %v2033, 8.507059e+37
  %v2035 = vand.u32 %v1918, 2147483648
  %v2036 = vor.u32 1.1754944e-38, %v2035
  %v2037 = vsel %vm2034, %v2036, %v2032
  %v2038 = vmul.f32 1.0, %v2037
  %v2039 = vmul.f32 %v1879, %v1933
  %v2040 = vmul.f32 %v1880, %v1948
  %v2041 = vmul.f32 %v1881, %v1963
  %v2042 = vmul.f32 %v1882, %v1978
  %v2043 = vmul.f32 %v1883, %v1993
  %v2044 = vmul.f32 %v1884, %v2008
  %v2045 = vmul.f32 %v1885, %v2023
  %v2046 = vmul.f32 %v1886, %v2038
  %v2047 = vsel %vm764, %v2039, 0.0
  %v2048 = vsel %vm765, %v2040, 0.0
  %v2049 = vsel %vm766, %v2041, 0.0
  %v2050 = vsel %vm767, %v2042, 0.0
  %v2051 = vsel %vm768, %v2043, 0.0
  %v2052 = vsel %vm769, %v2044, 0.0
  %v2053 = vsel %vm770, %v2045, 0.0
  %v2054 = vsel %vm771, %v2046, 0.0
  %vm2055 = vcmask 1043456
  %v2056 = vsel %vm2055, %v2047, 0.0
  %v2057 = vsel %vm2055, %v2048, 0.0
  %v2058 = vadd.f32 %v2056, %v2057
  %v2059 = vsel %vm2055, %v2049, 0.0
  %v2060 = vadd.f32 %v2058, %v2059
  %v2061 = vsel %vm2055, %v2050, 0.0
  %v2062 = vadd.f32 %v2060, %v2061
  %v2063 = vsel %vm2055, %v2051, 0.0
  %v2064 = vadd.f32 %v2062, %v2063
  %v2065 = vsel %vm2055, %v2052, 0.0
  %v2066 = vadd.f32 %v2064, %v2065
  %v2067 = vsel %vm2055, %v2053, 0.0
  %v2068 = vadd.f32 %v2066, %v2067
  %v2069 = vsel %vm2055, %v2054, 0.0
  %v2070 = vadd.f32 %v2068, %v2069
  %2071 = vadd.xlane.f32.xlu0 %v2070
  %v2072 = vpop.xlane.xlu0 %2071
  %v2073 = vmul.f32 %v2072, 0.001
  %v2074 = vsub.f32 %v2039, %v2073
  %v2075 = vsub.f32 %v2040, %v2073
  %v2076 = vsub.f32 %v2041, %v2073
  %v2077 = vsub.f32 %v2042, %v2073
  %v2078 = vsub.f32 %v2043, %v2073
  %v2079 = vsub.f32 %v2044, %v2073
  %v2080 = vsub.f32 %v2045, %v2073
  %v2081 = vsub.f32 %v2046, %v2073
  %v2082 = vsel %vm764, %v2074, 0.0
  %v2083 = vsel %vm765, %v2075, 0.0
  %v2084 = vsel %vm766, %v2076, 0.0
  %v2085 = vsel %vm767, %v2077, 0.0
  %v2086 = vsel %vm768, %v2078, 0.0
  %v2087 = vsel %vm769, %v2079, 0.0
  %v2088 = vsel %vm770, %v2080, 0.0
  %v2089 = vsel %vm771, %v2081, 0.0
  %v2090 = vmul.f32 %v2082, %v2082
  %v2091 = vmul.f32 %v2083, %v2083
  %v2092 = vmul.f32 %v2084, %v2084
  %v2093 = vmul.f32 %v2085, %v2085
  %v2094 = vmul.f32 %v2086, %v2086
  %v2095 = vmul.f32 %v2087, %v2087
  %v2096 = vmul.f32 %v2088, %v2088
  %v2097 = vmul.f32 %v2089, %v2089
  %v2098 = vsel %vm2055, %v2090, 0.0
  %v2099 = vsel %vm2055, %v2091, 0.0
  %v2100 = vadd.f32 %v2098, %v2099
  %v2101 = vsel %vm2055, %v2092, 0.0
  %v2102 = vadd.f32 %v2100, %v2101
  %v2103 = vsel %vm2055, %v2093, 0.0
  %v2104 = vadd.f32 %v2102, %v2103
  %v2105 = vsel %vm2055, %v2094, 0.0
  %v2106 = vadd.f32 %v2104, %v2105
  %v2107 = vsel %vm2055, %v2095, 0.0
  %v2108 = vadd.f32 %v2106, %v2107
  %v2109 = vsel %vm2055, %v2096, 0.0
  %v2110 = vadd.f32 %v2108, %v2109
  %v2111 = vsel %vm2055, %v2097, 0.0
  %v2112 = vadd.f32 %v2110, %v2111
  %2113 = vadd.xlane.f32.xlu0 %v2112
  %v2114 = vpop.xlane.xlu0 %2113
  %v2115 = vmul.f32 %v2114, 0.001
  %v2116 = vadd.f32 %v2115, 1e-05
  %v2117 = vrsqrt.pop %v2116
  %v2118 = vmul.f32 %v2117, %v2116
  %v2119 = vmul.f32 %v2118, %v2117
  %v2120 = vmul.f32 0.5, %v2119
  %v2121 = vsub.f32 1.5, %v2120
  %v2122 = vmul.f32 %v2117, %v2121
  %vm2123 = vweird.f32 %v2116
  %vm2124 = vweird.f32 %v2117
  %vm2125 = vmor %vm2123, %vm2124
  %v2126 = vsel %vm2125, %v2117, %v2122
  %v2127 = vmul.f32 %v1656, %v2126
  %2129 = vset.pattern.permute.xlu0 1
  %2130 = vperm.xlu0 %2129, %v2127
  %v2131 = vpop.permute.xlu0 %2130
  %v2133 = vmul.f32 %v2131, %v2074
  %v2134 = vmul.f32 %v2131, %v2075
  %v2135 = vmul.f32 %v2131, %v2076
  %v2136 = vmul.f32 %v2131, %v2077
  %v2137 = vmul.f32 %v2131, %v2078
  %v2138 = vmul.f32 %v2131, %v2079
  %v2139 = vmul.f32 %v2131, %v2080
  %v2140 = vmul.f32 %v2131, %v2081
  %2141 = vset.pattern.permute.xlu0 2
  %2142 = vperm.xlu0 %2141, %v1656
  %v2143 = vpop.permute.xlu0 %2142
  %v2145 = vadd.f32 %v2133, %v2143
  %v2146 = vadd.f32 %v2134, %v2143
  %v2147 = vadd.f32 %v2135, %v2143
  %v2148 = vadd.f32 %v2136, %v2143
  %v2149 = vadd.f32 %v2137, %v2143
  %v2150 = vadd.f32 %v2138, %v2143
  %v2151 = vadd.f32 %v2139, %v2143
  %v2152 = vadd.f32 %v2140, %v2143
  %v2153 = vld [vmem:[%s0 + $0x40] sm:$0x1]
  %v2154 = vld [vmem:[%s0 + $0x48] sm:$0x1]
  %2156 = vset.pattern.permute.xlu0 0
  %2157 = vperm.xlu0 %2156, %v2154
  %v2158 = vpop.permute.xlu0 %2157
  %2161 = vset.pattern.permute.xlu0 0
  %2162 = vperm.xlu0 %2161, %v2153
  %v2163 = vpop.permute.xlu0 %2162
  %v2165 = vmul.f32 %v2163, %v2145
  %v2166 = vmul.f32 %v2163, %v2146
  %v2167 = vmul.f32 %v2163, %v2147
  %v2168 = vmul.f32 %v2163, %v2148
  %v2169 = vmul.f32 %v2163, %v2149
  %v2170 = vmul.f32 %v2163, %v2150
  %v2171 = vmul.f32 %v2163, %v2151
  %v2172 = vmul.f32 %v2163, %v2152
  %v2173 = vadd.f32 %v2158, %v2165
  %v2174 = vadd.f32 %v2158, %v2166
  %v2175 = vadd.f32 %v2158, %v2167
  %v2176 = vadd.f32 %v2158, %v2168
  %v2177 = vadd.f32 %v2158, %v2169
  %v2178 = vadd.f32 %v2158, %v2170
  %v2179 = vadd.f32 %v2158, %v2171
  %v2180 = vadd.f32 %v2158, %v2172
  %2181 = vset.pattern.permute.xlu0 1
  %2182 = vperm.xlu0 %2181, %v2153
  %v2183 = vpop.permute.xlu0 %2182
  %v2193 = vrot.slane %v2145, 1
  %v2194 = vrot.slane %v2146, 1
  %v2195 = vrot.slane %v2147, 1
  %v2196 = vrot.slane %v2148, 1
  %v2197 = vrot.slane %v2149, 1
  %v2198 = vrot.slane %v2150, 1
  %v2199 = vrot.slane %v2151, 1
  %v2200 = vrot.slane %v2152, 1
  %v2209 = vmul.f32 %v2183, %v2193
  %v2210 = vmul.f32 %v2183, %v2194
  %v2211 = vmul.f32 %v2183, %v2195
  %v2212 = vmul.f32 %v2183, %v2196
  %v2213 = vmul.f32 %v2183, %v2197
  %v2214 = vmul.f32 %v2183, %v2198
  %v2215 = vmul.f32 %v2183, %v2199
  %v2216 = vmul.f32 %v2183, %v2200
  %v2217 = vadd.f32 %v2173, %v2209
  %v2218 = vadd.f32 %v2174, %v2210
  %v2219 = vadd.f32 %v2175, %v2211
  %v2220 = vadd.f32 %v2176, %v2212
  %v2221 = vadd.f32 %v2177, %v2213
  %v2222 = vadd.f32 %v2178, %v2214
  %v2223 = vadd.f32 %v2179, %v2215
  %v2224 = vadd.f32 %v2180, %v2216
  %2225 = vset.pattern.permute.xlu0 2
  %2226 = vperm.xlu0 %2225, %v2153
  %v2227 = vpop.permute.xlu0 %2226
  %v2229 = vrot.slane %v2145, 2
  %v2230 = vrot.slane %v2146, 2
  %v2231 = vrot.slane %v2147, 2
  %v2232 = vrot.slane %v2148, 2
  %v2233 = vrot.slane %v2149, 2
  %v2234 = vrot.slane %v2150, 2
  %v2235 = vrot.slane %v2151, 2
  %v2236 = vrot.slane %v2152, 2
  %v2245 = vmul.f32 %v2227, %v2229
  %v2246 = vmul.f32 %v2227, %v2230
  %v2247 = vmul.f32 %v2227, %v2231
  %v2248 = vmul.f32 %v2227, %v2232
  %v2249 = vmul.f32 %v2227, %v2233
  %v2250 = vmul.f32 %v2227, %v2234
  %v2251 = vmul.f32 %v2227, %v2235
  %v2252 = vmul.f32 %v2227, %v2236
  %v2253 = vadd.f32 %v2217, %v2245
  %v2254 = vadd.f32 %v2218, %v2246
  %v2255 = vadd.f32 %v2219, %v2247
  %v2256 = vadd.f32 %v2220, %v2248
  %v2257 = vadd.f32 %v2221, %v2249
  %v2258 = vadd.f32 %v2222, %v2250
  %v2259 = vadd.f32 %v2223, %v2251
  %v2260 = vadd.f32 %v2224, %v2252
  %2261 = vset.pattern.permute.xlu0 3
  %2262 = vperm.xlu0 %2261, %v2153
  %v2263 = vpop.permute.xlu0 %2262
  %v2265 = vrot.slane %v2145, 3
  %v2266 = vrot.slane %v2146, 3
  %v2267 = vrot.slane %v2147, 3
  %v2268 = vrot.slane %v2148, 3
  %v2269 = vrot.slane %v2149, 3
  %v2270 = vrot.slane %v2150, 3
  %v2271 = vrot.slane %v2151, 3
  %v2272 = vrot.slane %v2152, 3
  %v2281 = vmul.f32 %v2263, %v2265
  %v2282 = vmul.f32 %v2263, %v2266
  %v2283 = vmul.f32 %v2263, %v2267
  %v2284 = vmul.f32 %v2263, %v2268
  %v2285 = vmul.f32 %v2263, %v2269
  %v2286 = vmul.f32 %v2263, %v2270
  %v2287 = vmul.f32 %v2263, %v2271
  %v2288 = vmul.f32 %v2263, %v2272
  %v2289 = vadd.f32 %v2253, %v2281
  %v2290 = vadd.f32 %v2254, %v2282
  %v2291 = vadd.f32 %v2255, %v2283
  %v2292 = vadd.f32 %v2256, %v2284
  %v2293 = vadd.f32 %v2257, %v2285
  %v2294 = vadd.f32 %v2258, %v2286
  %v2295 = vadd.f32 %v2259, %v2287
  %v2296 = vadd.f32 %v2260, %v2288
  %v2297 = vxor.u32 %v2289, 2147483648
  %v2298 = vxor.u32 %v2290, 2147483648
  %v2299 = vxor.u32 %v2291, 2147483648
  %v2300 = vxor.u32 %v2292, 2147483648
  %v2301 = vxor.u32 %v2293, 2147483648
  %v2302 = vxor.u32 %v2294, 2147483648
  %v2303 = vxor.u32 %v2295, 2147483648
  %v2304 = vxor.u32 %v2296, 2147483648
  %v2305 = vmul.f32 %v2297, 1.442695
  %v2306 = vpow.pop %v2305
  %v2307 = vmul.f32 %v2298, 1.442695
  %v2308 = vpow.pop %v2307
  %v2309 = vmul.f32 %v2299, 1.442695
  %v2310 = vpow.pop %v2309
  %v2311 = vmul.f32 %v2300, 1.442695
  %v2312 = vpow.pop %v2311
  %v2313 = vmul.f32 %v2301, 1.442695
  %v2314 = vpow.pop %v2313
  %v2315 = vmul.f32 %v2302, 1.442695
  %v2316 = vpow.pop %v2315
  %v2317 = vmul.f32 %v2303, 1.442695
  %v2318 = vpow.pop %v2317
  %v2319 = vmul.f32 %v2304, 1.442695
  %v2320 = vpow.pop %v2319
  %v2321 = vadd.f32 %v2306, 1.0
  %v2322 = vadd.f32 %v2308, 1.0
  %v2323 = vadd.f32 %v2310, 1.0
  %v2324 = vadd.f32 %v2312, 1.0
  %v2325 = vadd.f32 %v2314, 1.0
  %v2326 = vadd.f32 %v2316, 1.0
  %v2327 = vadd.f32 %v2318, 1.0
  %v2328 = vadd.f32 %v2320, 1.0
  %v2329 = vrcp.pop %v2321
  %v2330 = vmul.f32 %v2321, %v2329
  %v2331 = vsub.f32 1.0, %v2330
  %v2332 = vmul.f32 %v2329, %v2331
  %v2333 = vadd.f32 %v2329, %v2332
  %vm2334 = vweird.f32 %v2321
  %vm2335 = vweird.f32 %v2329
  %vm2336 = vmor %vm2334, %vm2335
  %v2337 = vsel %vm2336, %v2329, %v2333
  %v2338 = vand.u32 2147483647, %v2321
  %vm2339 = vcmp.eq.f32.partialorder %v2338, 8.507059e+37
  %v2340 = vand.u32 %v2321, 2147483648
  %v2341 = vor.u32 1.1754944e-38, %v2340
  %v2342 = vsel %vm2339, %v2341, %v2337
  %v2343 = vmul.f32 1.0, %v2342
  %v2344 = vrcp.pop %v2322
  %v2345 = vmul.f32 %v2322, %v2344
  %v2346 = vsub.f32 1.0, %v2345
  %v2347 = vmul.f32 %v2344, %v2346
  %v2348 = vadd.f32 %v2344, %v2347
  %vm2349 = vweird.f32 %v2322
  %vm2350 = vweird.f32 %v2344
  %vm2351 = vmor %vm2349, %vm2350
  %v2352 = vsel %vm2351, %v2344, %v2348
  %v2353 = vand.u32 2147483647, %v2322
  %vm2354 = vcmp.eq.f32.partialorder %v2353, 8.507059e+37
  %v2355 = vand.u32 %v2322, 2147483648
  %v2356 = vor.u32 1.1754944e-38, %v2355
  %v2357 = vsel %vm2354, %v2356, %v2352
  %v2358 = vmul.f32 1.0, %v2357
  %v2359 = vrcp.pop %v2323
  %v2360 = vmul.f32 %v2323, %v2359
  %v2361 = vsub.f32 1.0, %v2360
  %v2362 = vmul.f32 %v2359, %v2361
  %v2363 = vadd.f32 %v2359, %v2362
  %vm2364 = vweird.f32 %v2323
  %vm2365 = vweird.f32 %v2359
  %vm2366 = vmor %vm2364, %vm2365
  %v2367 = vsel %vm2366, %v2359, %v2363
  %v2368 = vand.u32 2147483647, %v2323
  %vm2369 = vcmp.eq.f32.partialorder %v2368, 8.507059e+37
  %v2370 = vand.u32 %v2323, 2147483648
  %v2371 = vor.u32 1.1754944e-38, %v2370
  %v2372 = vsel %vm2369, %v2371, %v2367
  %v2373 = vmul.f32 1.0, %v2372
  %v2374 = vrcp.pop %v2324
  %v2375 = vmul.f32 %v2324, %v2374
  %v2376 = vsub.f32 1.0, %v2375
  %v2377 = vmul.f32 %v2374, %v2376
  %v2378 = vadd.f32 %v2374, %v2377
  %vm2379 = vweird.f32 %v2324
  %vm2380 = vweird.f32 %v2374
  %vm2381 = vmor %vm2379, %vm2380
  %v2382 = vsel %vm2381, %v2374, %v2378
  %v2383 = vand.u32 2147483647, %v2324
  %vm2384 = vcmp.eq.f32.partialorder %v2383, 8.507059e+37
  %v2385 = vand.u32 %v2324, 2147483648
  %v2386 = vor.u32 1.1754944e-38, %v2385
  %v2387 = vsel %vm2384, %v2386, %v2382
  %v2388 = vmul.f32 1.0, %v2387
  %v2389 = vrcp.pop %v2325
  %v2390 = vmul.f32 %v2325, %v2389
  %v2391 = vsub.f32 1.0, %v2390
  %v2392 = vmul.f32 %v2389, %v2391
  %v2393 = vadd.f32 %v2389, %v2392
  %vm2394 = vweird.f32 %v2325
  %vm2395 = vweird.f32 %v2389
  %vm2396 = vmor %vm2394, %vm2395
  %v2397 = vsel %vm2396, %v2389, %v2393
  %v2398 = vand.u32 2147483647, %v2325
  %vm2399 = vcmp.eq.f32.partialorder %v2398, 8.507059e+37
  %v2400 = vand.u32 %v2325, 2147483648
  %v2401 = vor.u32 1.1754944e-38, %v2400
  %v2402 = vsel %vm2399, %v2401, %v2397
  %v2403 = vmul.f32 1.0, %v2402
  %v2404 = vrcp.pop %v2326
  %v2405 = vmul.f32 %v2326, %v2404
  %v2406 = vsub.f32 1.0, %v2405
  %v2407 = vmul.f32 %v2404, %v2406
  %v2408 = vadd.f32 %v2404, %v2407
  %vm2409 = vweird.f32 %v2326
  %vm2410 = vweird.f32 %v2404
  %vm2411 = vmor %vm2409, %vm2410
  %v2412 = vsel %vm2411, %v2404, %v2408
  %v2413 = vand.u32 2147483647, %v2326
  %vm2414 = vcmp.eq.f32.partialorder %v2413, 8.507059e+37
  %v2415 = vand.u32 %v2326, 2147483648
  %v2416 = vor.u32 1.1754944e-38, %v2415
  %v2417 = vsel %vm2414, %v2416, %v2412
  %v2418 = vmul.f32 1.0, %v2417
  %v2419 = vrcp.pop %v2327
  %v2420 = vmul.f32 %v2327, %v2419
  %v2421 = vsub.f32 1.0, %v2420
  %v2422 = vmul.f32 %v2419, %v2421
  %v2423 = vadd.f32 %v2419, %v2422
  %vm2424 = vweird.f32 %v2327
  %vm2425 = vweird.f32 %v2419
  %vm2426 = vmor %vm2424, %vm2425
  %v2427 = vsel %vm2426, %v2419, %v2423
  %v2428 = vand.u32 2147483647, %v2327
  %vm2429 = vcmp.eq.f32.partialorder %v2428, 8.507059e+37
  %v2430 = vand.u32 %v2327, 2147483648
  %v2431 = vor.u32 1.1754944e-38, %v2430
  %v2432 = vsel %vm2429, %v2431, %v2427
  %v2433 = vmul.f32 1.0, %v2432
  %v2434 = vrcp.pop %v2328
  %v2435 = vmul.f32 %v2328, %v2434
  %v2436 = vsub.f32 1.0, %v2435
  %v2437 = vmul.f32 %v2434, %v2436
  %v2438 = vadd.f32 %v2434, %v2437
  %vm2439 = vweird.f32 %v2328
  %vm2440 = vweird.f32 %v2434
  %vm2441 = vmor %vm2439, %vm2440
  %v2442 = vsel %vm2441, %v2434, %v2438
  %v2443 = vand.u32 2147483647, %v2328
  %vm2444 = vcmp.eq.f32.partialorder %v2443, 8.507059e+37
  %v2445 = vand.u32 %v2328, 2147483648
  %v2446 = vor.u32 1.1754944e-38, %v2445
  %v2447 = vsel %vm2444, %v2446, %v2442
  %v2448 = vmul.f32 1.0, %v2447
  %v2457 = vrot.slane %v2358, 7
  %v2458 = vrot.slane %v2373, 6
  %v2459 = vrot.slane %v2388, 5
  %v2460 = vrot.slane %v2403, 4
  %v2461 = vrot.slane %v2418, 3
  %v2462 = vrot.slane %v2433, 2
  %v2463 = vrot.slane %v2448, 1
  %vm2464 = vcmask 1040384
  %v2465 = vsel %vm2464, %v2343, %v2457
  %vm2466 = vcmask 1042434
  %v2467 = vsel %vm2466, %v2458, %v2459
  %vm2468 = vcmask 1041408
  %v2469 = vsel %vm2468, %v2465, %v2467
  %vm2470 = vcmask 1044484
  %v2471 = vsel %vm2470, %v2460, %v2461
  %vm2472 = vcmask 1046534
  %v2473 = vsel %vm2472, %v2462, %v2463
  %vm2474 = vcmask 1045508
  %v2475 = vsel %vm2474, %v2471, %v2473
  %v2476 = vsel %vm2055, %v2469, %v2475
  %2478 = vst [vmem:[%s2] sm:$0xff] %v2476
  // Predicated region
  $region10: #{network_forward.1} parent=0 // pred_check
    _
  $region11: #{network_forward.1} parent=0 // pred_check_branch
    %2480 = sbr.rel (0) target = $region13
  $region12: #{network_forward.1} parent=0 // pred_region
    _
  $region13: #{network_forward.1} parent=0 // pred_fallthru
    _
  // Predicated region
  $region14: #{network_forward.1} parent=0 // pred_check
    _
  $region15: #{network_forward.1} parent=0 // pred_check_branch
    %2482 = sbr.rel (0) target = $region17
  $region16: #{network_forward.1} parent=0 // pred_region
    _
  $region17: #{network_forward.1} parent=0 // pred_fallthru
    _

</llo_original>
